<compile_context>
chip_gen: v6e
topology: v6e:2x2x1
jax: 0.10.0
libtpu: 0.0.40
codegen_flags: <defaults>
</compile_context>

<pallas_src>
import functools

import jax
import jax.numpy as jnp
from jax.experimental import pallas as pl
from jax.experimental.pallas import tpu as pltpu

_LANE = 128


def _ppeg_kernel(xpad_ref, w_ref, bias_ref, out_ref, *, H, W):
    # xpad_ref: (1, H+6, W+6, Cb)  zero-padded NHWC block (halo = 3 = max pad)
    # w_ref:    (7, 7, Cb)  combined depthwise taps (7x7 + 5x5 + 3x3 + identity)
    # bias_ref: (1, 1, Cb)  b7 + b5 + b3
    # out_ref:  (1, H, W, Cb)
    w = w_ref[...].astype(jnp.float32)                      # (7, 7, Cb)

    # Four independent accumulator chains keep the 4 VALU slots busy.
    accs = [None, None, None, None]
    for kw in range(7):
        # One sublane (W-axis) shifted slab per column offset, hoisted out of
        # the kh loop; cast per-slab (not the whole padded image).
        xw = xpad_ref[0, :, kw:kw + W, :].astype(jnp.float32)   # (H+6, W, Cb)
        for kh in range(7):
            tap = xw[kh:kh + H, :, :] * w[kh, kw, :]
            s = (kw * 7 + kh) % 4
            accs[s] = tap if accs[s] is None else accs[s] + tap
    # TODO(synk): at large H*W tiles, wrap the kh accumulation in a
    # lax.fori_loop(..., unroll=True) over row tiles to bound vreg live ranges.

    acc = (accs[0] + accs[1]) + (accs[2] + accs[3])
    acc = acc + bias_ref[...].astype(jnp.float32)           # broadcast (1,1,Cb)
    out_ref[0] = acc.astype(out_ref.dtype)


def _combine_weights(w7, w5, w3):
    """Fold 7x7 + 5x5 + 3x3 depthwise kernels + identity into one 7x7 kernel."""
    w = w7.astype(jnp.float32)
    w = w + jnp.pad(w5.astype(jnp.float32), ((1, 1), (1, 1), (0, 0)))
    w = w + jnp.pad(w3.astype(jnp.float32), ((2, 2), (2, 2), (0, 0)))
    return w.at[3, 3, :].add(1.0)                           # identity path


def ppeg_conv_nhwc(cnn_feat, w7, w5, w3, bias_total):
    """Fused y = x + dw7(x) + dw5(x) + dw3(x) + (b7+b5+b3), NHWC layout."""
    B, H, W, C = cnn_feat.shape
    Cp = ((C + _LANE - 1) // _LANE) * _LANE                 # lane-dense channels
    c_block = _LANE                                         # per-block C tile
    Hp, Wp = H + 6, W + 6

    # Single fused pad: 3-pixel spatial halo + channel pad to a lane multiple.
    # TODO(synk): fold the halo into the kernel with masked edge taps so the
    # standalone jnp.pad HBM round-trip disappears.
    xpad = jnp.pad(cnn_feat, ((0, 0), (3, 3), (3, 3), (0, Cp - C)))

    w = jnp.pad(_combine_weights(w7, w5, w3), ((0, 0), (0, 0), (0, Cp - C)))
    bias = jnp.pad(bias_total.astype(jnp.float32), ((0, Cp - C),)).reshape(1, 1, Cp)

    kernel = functools.partial(_ppeg_kernel, H=H, W=W)
    out = pl.pallas_call(
        kernel,
        out_shape=jax.ShapeDtypeStruct((B, H, W, Cp), cnn_feat.dtype),
        grid_spec=pltpu.PrefetchScalarGridSpec(
            num_scalar_prefetch=0,
            grid=(B, Cp // c_block),
            in_specs=[
                pl.BlockSpec((1, Hp, Wp, c_block), lambda b, c: (b, 0, 0, c)),
                pl.BlockSpec((7, 7, c_block), lambda b, c: (0, 0, c)),
                pl.BlockSpec((1, 1, c_block), lambda b, c: (0, 0, c)),
            ],
            out_specs=pl.BlockSpec((1, H, W, c_block), lambda b, c: (b, 0, 0, c)),
        ),
        compiler_params=pltpu.CompilerParams(
            dimension_semantics=("parallel", "parallel"),
            vmem_limit_bytes=48 * 1024 * 1024,
        ),
    )(xpad, w, bias)

    if Cp != C:
        out = out[..., :C]
    return out


def ppeg_forward(x, H, W, params):
    """x: (B, N, C) with N = 1 + H*W. Returns (B, N, C)."""
    B, N, C = x.shape
    assert N == 1 + H * W
    cls_token = x[:, 0:1, :]                       # (B, 1, C)
    feat_token = x[:, 1:, :]                       # (B, H*W, C)
    # torch: feat.transpose(1,2).view(B,C,H,W) == NHWC reshape (same HW order)
    cnn_feat = feat_token.reshape(B, H, W, C)      # (B, H, W, C)

    y = ppeg_conv_nhwc(cnn_feat,
                       params["w7"], params["w5"], params["w3"],
                       params["b7"] + params["b5"] + params["b3"])

    y = y.reshape(B, H * W, C)                     # == flatten(2).transpose(1,2)
    return jnp.concatenate([cls_token, y], axis=1)


def _reference_forward(x, H, W, params):
    """Pure-JAX reference using lax depthwise convs (for verification)."""
    B, N, C = x.shape
    cls_token = x[:, 0:1, :]
    feat = x[:, 1:, :].reshape(B, H, W, C)

    def dwconv(img, w_kkc, bias, k):
        w = w_kkc.reshape(k, k, 1, C)              # HWIO with I=1, groups=C
        out = jax.lax.conv_general_dilated(
            img, w, window_strides=(1, 1), padding="SAME",
            dimension_numbers=("NHWC", "HWIO", "NHWC"),
            feature_group_count=C)
        return out + bias

    y = (feat
         + dwconv(feat, params["w7"], params["b7"], 7)
         + dwconv(feat, params["w5"], params["b5"], 5)
         + dwconv(feat, params["w3"], params["b3"], 3))
    return jnp.concatenate([cls_token, y.reshape(B, H * W, C)], axis=1)


def init_params(key, C):
    ks = jax.random.split(key, 6)
    scale = 0.05
    # depthwise weights stored as (K, K, C); torch stores (C, 1, K, K)
    return {
        "w7": scale * jax.random.normal(ks[0], (7, 7, C), jnp.float32),
        "w5": scale * jax.random.normal(ks[1], (5, 5, C), jnp.float32),
        "w3": scale * jax.random.normal(ks[2], (3, 3, C), jnp.float32),
        "b7": scale * jax.random.normal(ks[3], (C,), jnp.float32),
        "b5": scale * jax.random.normal(ks[4], (C,), jnp.float32),
        "b3": scale * jax.random.normal(ks[5], (C,), jnp.float32),
    }


if __name__ == "__main__":
    B, C, H, W = 2, 32, 8, 8
    N = 1 + H * W

    key = jax.random.PRNGKey(0)
    kx, kp = jax.random.split(key)
    x = jax.random.normal(kx, (B, N, C), jnp.float32)
    params = init_params(kp, C)

    out = jax.block_until_ready(ppeg_forward(x, H, W, params))
    ref = jax.block_until_ready(_reference_forward(x, H, W, params))

    assert out.shape == (B, N, C)
    assert jnp.allclose(out, ref, atol=1e-4, rtol=1e-4), "mismatch vs reference"

    print("KERNEL_OK")
</pallas_src>

<mosaic_0001>
module attributes {stable_mosaic.version = 11 : i64} {
  func.func @_ppeg_kernel(%arg0: i32, %arg1: i32, %arg2: memref<1x14x14x128xf32, #tpu.memory_space<vmem>>, %arg3: memref<7x7x128xf32, #tpu.memory_space<vmem>>, %arg4: memref<1x1x128xf32, #tpu.memory_space<vmem>>, %arg5: memref<1x8x8x128xf32, #tpu.memory_space<vmem>>) attributes {dimension_semantics = [#tpu.dimension_semantics<parallel>, #tpu.dimension_semantics<parallel>], iteration_bounds = array<i64: 2, 1>, scalar_prefetch = 0 : i64, scratch_operands = 0 : i64, tpu.core_type = #tpu.core_type<tc>, window_params = [{transform_indices = @transform_0, window_bounds = array<i64: 1, 14, 14, 128>}, {transform_indices = @transform_1, window_bounds = array<i64: 7, 7, 128>}, {transform_indices = @transform_2, window_bounds = array<i64: 1, 1, 128>}, {transform_indices = @transform_3, window_bounds = array<i64: 1, 8, 8, 128>}]} {
    %c0 = arith.constant 0 : index
    %c0_0 = arith.constant 0 : index
    %c0_1 = arith.constant 0 : index
    %0 = vector.load %arg3[%c0, %c0_0, %c0_1] : memref<7x7x128xf32, #tpu.memory_space<vmem>>, vector<7x7x128xf32>
    %c0_2 = arith.constant 0 : index
    %c0_3 = arith.constant 0 : index
    %c0_4 = arith.constant 0 : index
    %c0_5 = arith.constant 0 : index
    %1 = vector.load %arg2[%c0_2, %c0_3, %c0_4, %c0_5] : memref<1x14x14x128xf32, #tpu.memory_space<vmem>>, vector<1x14x8x128xf32>
    %2 = vector.shape_cast %1 : vector<1x14x8x128xf32> to vector<14x8x128xf32>
    %3 = vector.extract_strided_slice %2 {offsets = [0, 0, 0], sizes = [8, 8, 128], strides = [1, 1, 1]} : vector<14x8x128xf32> to vector<8x8x128xf32>
    %4 = vector.extract_strided_slice %0 {offsets = [0, 0, 0], sizes = [1, 1, 128], strides = [1, 1, 1]} : vector<7x7x128xf32> to vector<1x1x128xf32>
    %5 = vector.shape_cast %4 : vector<1x1x128xf32> to vector<128xf32>
    %6 = vector.shape_cast %5 : vector<128xf32> to vector<1x1x128xf32>
    %7 = vector.broadcast %6 : vector<1x1x128xf32> to vector<8x8x128xf32>
    %8 = arith.mulf %3, %7 : vector<8x8x128xf32>
    %9 = vector.extract_strided_slice %2 {offsets = [1, 0, 0], sizes = [8, 8, 128], strides = [1, 1, 1]} : vector<14x8x128xf32> to vector<8x8x128xf32>
    %10 = vector.extract_strided_slice %0 {offsets = [1, 0, 0], sizes = [1, 1, 128], strides = [1, 1, 1]} : vector<7x7x128xf32> to vector<1x1x128xf32>
    %11 = vector.shape_cast %10 : vector<1x1x128xf32> to vector<128xf32>
    %12 = vector.shape_cast %11 : vector<128xf32> to vector<1x1x128xf32>
    %13 = vector.broadcast %12 : vector<1x1x128xf32> to vector<8x8x128xf32>
    %14 = arith.mulf %9, %13 : vector<8x8x128xf32>
    %15 = vector.extract_strided_slice %2 {offsets = [2, 0, 0], sizes = [8, 8, 128], strides = [1, 1, 1]} : vector<14x8x128xf32> to vector<8x8x128xf32>
    %16 = vector.extract_strided_slice %0 {offsets = [2, 0, 0], sizes = [1, 1, 128], strides = [1, 1, 1]} : vector<7x7x128xf32> to vector<1x1x128xf32>
    %17 = vector.shape_cast %16 : vector<1x1x128xf32> to vector<128xf32>
    %18 = vector.shape_cast %17 : vector<128xf32> to vector<1x1x128xf32>
    %19 = vector.broadcast %18 : vector<1x1x128xf32> to vector<8x8x128xf32>
    %20 = arith.mulf %15, %19 : vector<8x8x128xf32>
    %21 = vector.extract_strided_slice %2 {offsets = [3, 0, 0], sizes = [8, 8, 128], strides = [1, 1, 1]} : vector<14x8x128xf32> to vector<8x8x128xf32>
    %22 = vector.extract_strided_slice %0 {offsets = [3, 0, 0], sizes = [1, 1, 128], strides = [1, 1, 1]} : vector<7x7x128xf32> to vector<1x1x128xf32>
    %23 = vector.shape_cast %22 : vector<1x1x128xf32> to vector<128xf32>
    %24 = vector.shape_cast %23 : vector<128xf32> to vector<1x1x128xf32>
    %25 = vector.broadcast %24 : vector<1x1x128xf32> to vector<8x8x128xf32>
    %26 = arith.mulf %21, %25 : vector<8x8x128xf32>
    %27 = vector.extract_strided_slice %2 {offsets = [4, 0, 0], sizes = [8, 8, 128], strides = [1, 1, 1]} : vector<14x8x128xf32> to vector<8x8x128xf32>
    %28 = vector.extract_strided_slice %0 {offsets = [4, 0, 0], sizes = [1, 1, 128], strides = [1, 1, 1]} : vector<7x7x128xf32> to vector<1x1x128xf32>
    %29 = vector.shape_cast %28 : vector<1x1x128xf32> to vector<128xf32>
    %30 = vector.shape_cast %29 : vector<128xf32> to vector<1x1x128xf32>
    %31 = vector.broadcast %30 : vector<1x1x128xf32> to vector<8x8x128xf32>
    %32 = arith.mulf %27, %31 : vector<8x8x128xf32>
    %33 = arith.addf %8, %32 : vector<8x8x128xf32>
    %34 = vector.extract_strided_slice %2 {offsets = [5, 0, 0], sizes = [8, 8, 128], strides = [1, 1, 1]} : vector<14x8x128xf32> to vector<8x8x128xf32>
    %35 = vector.extract_strided_slice %0 {offsets = [5, 0, 0], sizes = [1, 1, 128], strides = [1, 1, 1]} : vector<7x7x128xf32> to vector<1x1x128xf32>
    %36 = vector.shape_cast %35 : vector<1x1x128xf32> to vector<128xf32>
    %37 = vector.shape_cast %36 : vector<128xf32> to vector<1x1x128xf32>
    %38 = vector.broadcast %37 : vector<1x1x128xf32> to vector<8x8x128xf32>
    %39 = arith.mulf %34, %38 : vector<8x8x128xf32>
    %40 = arith.addf %14, %39 : vector<8x8x128xf32>
    %41 = vector.extract_strided_slice %2 {offsets = [6, 0, 0], sizes = [8, 8, 128], strides = [1, 1, 1]} : vector<14x8x128xf32> to vector<8x8x128xf32>
    %42 = vector.extract_strided_slice %0 {offsets = [6, 0, 0], sizes = [1, 1, 128], strides = [1, 1, 1]} : vector<7x7x128xf32> to vector<1x1x128xf32>
    %43 = vector.shape_cast %42 : vector<1x1x128xf32> to vector<128xf32>
    %44 = vector.shape_cast %43 : vector<128xf32> to vector<1x1x128xf32>
    %45 = vector.broadcast %44 : vector<1x1x128xf32> to vector<8x8x128xf32>
    %46 = arith.mulf %41, %45 : vector<8x8x128xf32>
    %47 = arith.addf %20, %46 : vector<8x8x128xf32>
    %c0_6 = arith.constant 0 : index
    %c0_7 = arith.constant 0 : index
    %c1 = arith.constant 1 : index
    %c0_8 = arith.constant 0 : index
    %48 = vector.load %arg2[%c0_6, %c0_7, %c1, %c0_8] : memref<1x14x14x128xf32, #tpu.memory_space<vmem>>, vector<1x14x8x128xf32>
    %49 = vector.shape_cast %48 : vector<1x14x8x128xf32> to vector<14x8x128xf32>
    %50 = vector.extract_strided_slice %49 {offsets = [0, 0, 0], sizes = [8, 8, 128], strides = [1, 1, 1]} : vector<14x8x128xf32> to vector<8x8x128xf32>
    %51 = vector.extract_strided_slice %0 {offsets = [0, 1, 0], sizes = [1, 1, 128], strides = [1, 1, 1]} : vector<7x7x128xf32> to vector<1x1x128xf32>
    %52 = vector.shape_cast %51 : vector<1x1x128xf32> to vector<128xf32>
    %53 = vector.shape_cast %52 : vector<128xf32> to vector<1x1x128xf32>
    %54 = vector.broadcast %53 : vector<1x1x128xf32> to vector<8x8x128xf32>
    %55 = arith.mulf %50, %54 : vector<8x8x128xf32>
    %56 = arith.addf %26, %55 : vector<8x8x128xf32>
    %57 = vector.extract_strided_slice %49 {offsets = [1, 0, 0], sizes = [8, 8, 128], strides = [1, 1, 1]} : vector<14x8x128xf32> to vector<8x8x128xf32>
    %58 = vector.extract_strided_slice %0 {offsets = [1, 1, 0], sizes = [1, 1, 128], strides = [1, 1, 1]} : vector<7x7x128xf32> to vector<1x1x128xf32>
    %59 = vector.shape_cast %58 : vector<1x1x128xf32> to vector<128xf32>
    %60 = vector.shape_cast %59 : vector<128xf32> to vector<1x1x128xf32>
    %61 = vector.broadcast %60 : vector<1x1x128xf32> to vector<8x8x128xf32>
    %62 = arith.mulf %57, %61 : vector<8x8x128xf32>
    %63 = arith.addf %33, %62 : vector<8x8x128xf32>
    %64 = vector.extract_strided_slice %49 {offsets = [2, 0, 0], sizes = [8, 8, 128], strides = [1, 1, 1]} : vector<14x8x128xf32> to vector<8x8x128xf32>
    %65 = vector.extract_strided_slice %0 {offsets = [2, 1, 0], sizes = [1, 1, 128], strides = [1, 1, 1]} : vector<7x7x128xf32> to vector<1x1x128xf32>
    %66 = vector.shape_cast %65 : vector<1x1x128xf32> to vector<128xf32>
    %67 = vector.shape_cast %66 : vector<128xf32> to vector<1x1x128xf32>
    %68 = vector.broadcast %67 : vector<1x1x128xf32> to vector<8x8x128xf32>
    %69 = arith.mulf %64, %68 : vector<8x8x128xf32>
    %70 = arith.addf %40, %69 : vector<8x8x128xf32>
    %71 = vector.extract_strided_slice %49 {offsets = [3, 0, 0], sizes = [8, 8, 128], strides = [1, 1, 1]} : vector<14x8x128xf32> to vector<8x8x128xf32>
    %72 = vector.extract_strided_slice %0 {offsets = [3, 1, 0], sizes = [1, 1, 128], strides = [1, 1, 1]} : vector<7x7x128xf32> to vector<1x1x128xf32>
    %73 = vector.shape_cast %72 : vector<1x1x128xf32> to vector<128xf32>
    %74 = vector.shape_cast %73 : vector<128xf32> to vector<1x1x128xf32>
    %75 = vector.broadcast %74 : vector<1x1x128xf32> to vector<8x8x128xf32>
    %76 = arith.mulf %71, %75 : vector<8x8x128xf32>
    %77 = arith.addf %47, %76 : vector<8x8x128xf32>
    %78 = vector.extract_strided_slice %49 {offsets = [4, 0, 0], sizes = [8, 8, 128], strides = [1, 1, 1]} : vector<14x8x128xf32> to vector<8x8x128xf32>
    %79 = vector.extract_strided_slice %0 {offsets = [4, 1, 0], sizes = [1, 1, 128], strides = [1, 1, 1]} : vector<7x7x128xf32> to vector<1x1x128xf32>
    %80 = vector.shape_cast %79 : vector<1x1x128xf32> to vector<128xf32>
    %81 = vector.shape_cast %80 : vector<128xf32> to vector<1x1x128xf32>
    %82 = vector.broadcast %81 : vector<1x1x128xf32> to vector<8x8x128xf32>
    %83 = arith.mulf %78, %82 : vector<8x8x128xf32>
    %84 = arith.addf %56, %83 : vector<8x8x128xf32>
    %85 = vector.extract_strided_slice %49 {offsets = [5, 0, 0], sizes = [8, 8, 128], strides = [1, 1, 1]} : vector<14x8x128xf32> to vector<8x8x128xf32>
    %86 = vector.extract_strided_slice %0 {offsets = [5, 1, 0], sizes = [1, 1, 128], strides = [1, 1, 1]} : vector<7x7x128xf32> to vector<1x1x128xf32>
    %87 = vector.shape_cast %86 : vector<1x1x128xf32> to vector<128xf32>
    %88 = vector.shape_cast %87 : vector<128xf32> to vector<1x1x128xf32>
    %89 = vector.broadcast %88 : vector<1x1x128xf32> to vector<8x8x128xf32>
    %90 = arith.mulf %85, %89 : vector<8x8x128xf32>
    %91 = arith.addf %63, %90 : vector<8x8x128xf32>
    %92 = vector.extract_strided_slice %49 {offsets = [6, 0, 0], sizes = [8, 8, 128], strides = [1, 1, 1]} : vector<14x8x128xf32> to vector<8x8x128xf32>
    %93 = vector.extract_strided_slice %0 {offsets = [6, 1, 0], sizes = [1, 1, 128], strides = [1, 1, 1]} : vector<7x7x128xf32> to vector<1x1x128xf32>
    %94 = vector.shape_cast %93 : vector<1x1x128xf32> to vector<128xf32>
    %95 = vector.shape_cast %94 : vector<128xf32> to vector<1x1x128xf32>
    %96 = vector.broadcast %95 : vector<1x1x128xf32> to vector<8x8x128xf32>
    %97 = arith.mulf %92, %96 : vector<8x8x128xf32>
    %98 = arith.addf %70, %97 : vector<8x8x128xf32>
    %c0_9 = arith.constant 0 : index
    %c0_10 = arith.constant 0 : index
    %c2 = arith.constant 2 : index
    %c0_11 = arith.constant 0 : index
    %99 = vector.load %arg2[%c0_9, %c0_10, %c2, %c0_11] : memref<1x14x14x128xf32, #tpu.memory_space<vmem>>, vector<1x14x8x128xf32>
    %100 = vector.shape_cast %99 : vector<1x14x8x128xf32> to vector<14x8x128xf32>
    %101 = vector.extract_strided_slice %100 {offsets = [0, 0, 0], sizes = [8, 8, 128], strides = [1, 1, 1]} : vector<14x8x128xf32> to vector<8x8x128xf32>
    %102 = vector.extract_strided_slice %0 {offsets = [0, 2, 0], sizes = [1, 1, 128], strides = [1, 1, 1]} : vector<7x7x128xf32> to vector<1x1x128xf32>
    %103 = vector.shape_cast %102 : vector<1x1x128xf32> to vector<128xf32>
    %104 = vector.shape_cast %103 : vector<128xf32> to vector<1x1x128xf32>
    %105 = vector.broadcast %104 : vector<1x1x128xf32> to vector<8x8x128xf32>
    %106 = arith.mulf %101, %105 : vector<8x8x128xf32>
    %107 = arith.addf %77, %106 : vector<8x8x128xf32>
    %108 = vector.extract_strided_slice %100 {offsets = [1, 0, 0], sizes = [8, 8, 128], strides = [1, 1, 1]} : vector<14x8x128xf32> to vector<8x8x128xf32>
    %109 = vector.extract_strided_slice %0 {offsets = [1, 2, 0], sizes = [1, 1, 128], strides = [1, 1, 1]} : vector<7x7x128xf32> to vector<1x1x128xf32>
    %110 = vector.shape_cast %109 : vector<1x1x128xf32> to vector<128xf32>
    %111 = vector.shape_cast %110 : vector<128xf32> to vector<1x1x128xf32>
    %112 = vector.broadcast %111 : vector<1x1x128xf32> to vector<8x8x128xf32>
    %113 = arith.mulf %108, %112 : vector<8x8x128xf32>
    %114 = arith.addf %84, %113 : vector<8x8x128xf32>
    %115 = vector.extract_strided_slice %100 {offsets = [2, 0, 0], sizes = [8, 8, 128], strides = [1, 1, 1]} : vector<14x8x128xf32> to vector<8x8x128xf32>
    %116 = vector.extract_strided_slice %0 {offsets = [2, 2, 0], sizes = [1, 1, 128], strides = [1, 1, 1]} : vector<7x7x128xf32> to vector<1x1x128xf32>
    %117 = vector.shape_cast %116 : vector<1x1x128xf32> to vector<128xf32>
    %118 = vector.shape_cast %117 : vector<128xf32> to vector<1x1x128xf32>
    %119 = vector.broadcast %118 : vector<1x1x128xf32> to vector<8x8x128xf32>
    %120 = arith.mulf %115, %119 : vector<8x8x128xf32>
    %121 = arith.addf %91, %120 : vector<8x8x128xf32>
    %122 = vector.extract_strided_slice %100 {offsets = [3, 0, 0], sizes = [8, 8, 128], strides = [1, 1, 1]} : vector<14x8x128xf32> to vector<8x8x128xf32>
    %123 = vector.extract_strided_slice %0 {offsets = [3, 2, 0], sizes = [1, 1, 128], strides = [1, 1, 1]} : vector<7x7x128xf32> to vector<1x1x128xf32>
    %124 = vector.shape_cast %123 : vector<1x1x128xf32> to vector<128xf32>
    %125 = vector.shape_cast %124 : vector<128xf32> to vector<1x1x128xf32>
    %126 = vector.broadcast %125 : vector<1x1x128xf32> to vector<8x8x128xf32>
    %127 = arith.mulf %122, %126 : vector<8x8x128xf32>
    %128 = arith.addf %98, %127 : vector<8x8x128xf32>
    %129 = vector.extract_strided_slice %100 {offsets = [4, 0, 0], sizes = [8, 8, 128], strides = [1, 1, 1]} : vector<14x8x128xf32> to vector<8x8x128xf32>
    %130 = vector.extract_strided_slice %0 {offsets = [4, 2, 0], sizes = [1, 1, 128], strides = [1, 1, 1]} : vector<7x7x128xf32> to vector<1x1x128xf32>
    %131 = vector.shape_cast %130 : vector<1x1x128xf32> to vector<128xf32>
    %132 = vector.shape_cast %131 : vector<128xf32> to vector<1x1x128xf32>
    %133 = vector.broadcast %132 : vector<1x1x128xf32> to vector<8x8x128xf32>
    %134 = arith.mulf %129, %133 : vector<8x8x128xf32>
    %135 = arith.addf %107, %134 : vector<8x8x128xf32>
    %136 = vector.extract_strided_slice %100 {offsets = [5, 0, 0], sizes = [8, 8, 128], strides = [1, 1, 1]} : vector<14x8x128xf32> to vector<8x8x128xf32>
    %137 = vector.extract_strided_slice %0 {offsets = [5, 2, 0], sizes = [1, 1, 128], strides = [1, 1, 1]} : vector<7x7x128xf32> to vector<1x1x128xf32>
    %138 = vector.shape_cast %137 : vector<1x1x128xf32> to vector<128xf32>
    %139 = vector.shape_cast %138 : vector<128xf32> to vector<1x1x128xf32>
    %140 = vector.broadcast %139 : vector<1x1x128xf32> to vector<8x8x128xf32>
    %141 = arith.mulf %136, %140 : vector<8x8x128xf32>
    %142 = arith.addf %114, %141 : vector<8x8x128xf32>
    %143 = vector.extract_strided_slice %100 {offsets = [6, 0, 0], sizes = [8, 8, 128], strides = [1, 1, 1]} : vector<14x8x128xf32> to vector<8x8x128xf32>
    %144 = vector.extract_strided_slice %0 {offsets = [6, 2, 0], sizes = [1, 1, 128], strides = [1, 1, 1]} : vector<7x7x128xf32> to vector<1x1x128xf32>
    %145 = vector.shape_cast %144 : vector<1x1x128xf32> to vector<128xf32>
    %146 = vector.shape_cast %145 : vector<128xf32> to vector<1x1x128xf32>
    %147 = vector.broadcast %146 : vector<1x1x128xf32> to vector<8x8x128xf32>
    %148 = arith.mulf %143, %147 : vector<8x8x128xf32>
    %149 = arith.addf %121, %148 : vector<8x8x128xf32>
    %c0_12 = arith.constant 0 : index
    %c0_13 = arith.constant 0 : index
    %c3 = arith.constant 3 : index
    %c0_14 = arith.constant 0 : index
    %150 = vector.load %arg2[%c0_12, %c0_13, %c3, %c0_14] : memref<1x14x14x128xf32, #tpu.memory_space<vmem>>, vector<1x14x8x128xf32>
    %151 = vector.shape_cast %150 : vector<1x14x8x128xf32> to vector<14x8x128xf32>
    %152 = vector.extract_strided_slice %151 {offsets = [0, 0, 0], sizes = [8, 8, 128], strides = [1, 1, 1]} : vector<14x8x128xf32> to vector<8x8x128xf32>
    %153 = vector.extract_strided_slice %0 {offsets = [0, 3, 0], sizes = [1, 1, 128], strides = [1, 1, 1]} : vector<7x7x128xf32> to vector<1x1x128xf32>
    %154 = vector.shape_cast %153 : vector<1x1x128xf32> to vector<128xf32>
    %155 = vector.shape_cast %154 : vector<128xf32> to vector<1x1x128xf32>
    %156 = vector.broadcast %155 : vector<1x1x128xf32> to vector<8x8x128xf32>
    %157 = arith.mulf %152, %156 : vector<8x8x128xf32>
    %158 = arith.addf %128, %157 : vector<8x8x128xf32>
    %159 = vector.extract_strided_slice %151 {offsets = [1, 0, 0], sizes = [8, 8, 128], strides = [1, 1, 1]} : vector<14x8x128xf32> to vector<8x8x128xf32>
    %160 = vector.extract_strided_slice %0 {offsets = [1, 3, 0], sizes = [1, 1, 128], strides = [1, 1, 1]} : vector<7x7x128xf32> to vector<1x1x128xf32>
    %161 = vector.shape_cast %160 : vector<1x1x128xf32> to vector<128xf32>
    %162 = vector.shape_cast %161 : vector<128xf32> to vector<1x1x128xf32>
    %163 = vector.broadcast %162 : vector<1x1x128xf32> to vector<8x8x128xf32>
    %164 = arith.mulf %159, %163 : vector<8x8x128xf32>
    %165 = arith.addf %135, %164 : vector<8x8x128xf32>
    %166 = vector.extract_strided_slice %151 {offsets = [2, 0, 0], sizes = [8, 8, 128], strides = [1, 1, 1]} : vector<14x8x128xf32> to vector<8x8x128xf32>
    %167 = vector.extract_strided_slice %0 {offsets = [2, 3, 0], sizes = [1, 1, 128], strides = [1, 1, 1]} : vector<7x7x128xf32> to vector<1x1x128xf32>
    %168 = vector.shape_cast %167 : vector<1x1x128xf32> to vector<128xf32>
    %169 = vector.shape_cast %168 : vector<128xf32> to vector<1x1x128xf32>
    %170 = vector.broadcast %169 : vector<1x1x128xf32> to vector<8x8x128xf32>
    %171 = arith.mulf %166, %170 : vector<8x8x128xf32>
    %172 = arith.addf %142, %171 : vector<8x8x128xf32>
    %173 = vector.extract_strided_slice %151 {offsets = [3, 0, 0], sizes = [8, 8, 128], strides = [1, 1, 1]} : vector<14x8x128xf32> to vector<8x8x128xf32>
    %174 = vector.extract_strided_slice %0 {offsets = [3, 3, 0], sizes = [1, 1, 128], strides = [1, 1, 1]} : vector<7x7x128xf32> to vector<1x1x128xf32>
    %175 = vector.shape_cast %174 : vector<1x1x128xf32> to vector<128xf32>
    %176 = vector.shape_cast %175 : vector<128xf32> to vector<1x1x128xf32>
    %177 = vector.broadcast %176 : vector<1x1x128xf32> to vector<8x8x128xf32>
    %178 = arith.mulf %173, %177 : vector<8x8x128xf32>
    %179 = arith.addf %149, %178 : vector<8x8x128xf32>
    %180 = vector.extract_strided_slice %151 {offsets = [4, 0, 0], sizes = [8, 8, 128], strides = [1, 1, 1]} : vector<14x8x128xf32> to vector<8x8x128xf32>
    %181 = vector.extract_strided_slice %0 {offsets = [4, 3, 0], sizes = [1, 1, 128], strides = [1, 1, 1]} : vector<7x7x128xf32> to vector<1x1x128xf32>
    %182 = vector.shape_cast %181 : vector<1x1x128xf32> to vector<128xf32>
    %183 = vector.shape_cast %182 : vector<128xf32> to vector<1x1x128xf32>
    %184 = vector.broadcast %183 : vector<1x1x128xf32> to vector<8x8x128xf32>
    %185 = arith.mulf %180, %184 : vector<8x8x128xf32>
    %186 = arith.addf %158, %185 : vector<8x8x128xf32>
    %187 = vector.extract_strided_slice %151 {offsets = [5, 0, 0], sizes = [8, 8, 128], strides = [1, 1, 1]} : vector<14x8x128xf32> to vector<8x8x128xf32>
    %188 = vector.extract_strided_slice %0 {offsets = [5, 3, 0], sizes = [1, 1, 128], strides = [1, 1, 1]} : vector<7x7x128xf32> to vector<1x1x128xf32>
    %189 = vector.shape_cast %188 : vector<1x1x128xf32> to vector<128xf32>
    %190 = vector.shape_cast %189 : vector<128xf32> to vector<1x1x128xf32>
    %191 = vector.broadcast %190 : vector<1x1x128xf32> to vector<8x8x128xf32>
    %192 = arith.mulf %187, %191 : vector<8x8x128xf32>
    %193 = arith.addf %165, %192 : vector<8x8x128xf32>
    %194 = vector.extract_strided_slice %151 {offsets = [6, 0, 0], sizes = [8, 8, 128], strides = [1, 1, 1]} : vector<14x8x128xf32> to vector<8x8x128xf32>
    %195 = vector.extract_strided_slice %0 {offsets = [6, 3, 0], sizes = [1, 1, 128], strides = [1, 1, 1]} : vector<7x7x128xf32> to vector<1x1x128xf32>
    %196 = vector.shape_cast %195 : vector<1x1x128xf32> to vector<128xf32>
    %197 = vector.shape_cast %196 : vector<128xf32> to vector<1x1x128xf32>
    %198 = vector.broadcast %197 : vector<1x1x128xf32> to vector<8x8x128xf32>
    %199 = arith.mulf %194, %198 : vector<8x8x128xf32>
    %200 = arith.addf %172, %199 : vector<8x8x128xf32>
    %c0_15 = arith.constant 0 : index
    %c0_16 = arith.constant 0 : index
    %c4 = arith.constant 4 : index
    %c0_17 = arith.constant 0 : index
    %201 = vector.load %arg2[%c0_15, %c0_16, %c4, %c0_17] : memref<1x14x14x128xf32, #tpu.memory_space<vmem>>, vector<1x14x8x128xf32>
    %202 = vector.shape_cast %201 : vector<1x14x8x128xf32> to vector<14x8x128xf32>
    %203 = vector.extract_strided_slice %202 {offsets = [0, 0, 0], sizes = [8, 8, 128], strides = [1, 1, 1]} : vector<14x8x128xf32> to vector<8x8x128xf32>
    %204 = vector.extract_strided_slice %0 {offsets = [0, 4, 0], sizes = [1, 1, 128], strides = [1, 1, 1]} : vector<7x7x128xf32> to vector<1x1x128xf32>
    %205 = vector.shape_cast %204 : vector<1x1x128xf32> to vector<128xf32>
    %206 = vector.shape_cast %205 : vector<128xf32> to vector<1x1x128xf32>
    %207 = vector.broadcast %206 : vector<1x1x128xf32> to vector<8x8x128xf32>
    %208 = arith.mulf %203, %207 : vector<8x8x128xf32>
    %209 = arith.addf %179, %208 : vector<8x8x128xf32>
    %210 = vector.extract_strided_slice %202 {offsets = [1, 0, 0], sizes = [8, 8, 128], strides = [1, 1, 1]} : vector<14x8x128xf32> to vector<8x8x128xf32>
    %211 = vector.extract_strided_slice %0 {offsets = [1, 4, 0], sizes = [1, 1, 128], strides = [1, 1, 1]} : vector<7x7x128xf32> to vector<1x1x128xf32>
    %212 = vector.shape_cast %211 : vector<1x1x128xf32> to vector<128xf32>
    %213 = vector.shape_cast %212 : vector<128xf32> to vector<1x1x128xf32>
    %214 = vector.broadcast %213 : vector<1x1x128xf32> to vector<8x8x128xf32>
    %215 = arith.mulf %210, %214 : vector<8x8x128xf32>
    %216 = arith.addf %186, %215 : vector<8x8x128xf32>
    %217 = vector.extract_strided_slice %202 {offsets = [2, 0, 0], sizes = [8, 8, 128], strides = [1, 1, 1]} : vector<14x8x128xf32> to vector<8x8x128xf32>
    %218 = vector.extract_strided_slice %0 {offsets = [2, 4, 0], sizes = [1, 1, 128], strides = [1, 1, 1]} : vector<7x7x128xf32> to vector<1x1x128xf32>
    %219 = vector.shape_cast %218 : vector<1x1x128xf32> to vector<128xf32>
    %220 = vector.shape_cast %219 : vector<128xf32> to vector<1x1x128xf32>
    %221 = vector.broadcast %220 : vector<1x1x128xf32> to vector<8x8x128xf32>
    %222 = arith.mulf %217, %221 : vector<8x8x128xf32>
    %223 = arith.addf %193, %222 : vector<8x8x128xf32>
    %224 = vector.extract_strided_slice %202 {offsets = [3, 0, 0], sizes = [8, 8, 128], strides = [1, 1, 1]} : vector<14x8x128xf32> to vector<8x8x128xf32>
    %225 = vector.extract_strided_slice %0 {offsets = [3, 4, 0], sizes = [1, 1, 128], strides = [1, 1, 1]} : vector<7x7x128xf32> to vector<1x1x128xf32>
    %226 = vector.shape_cast %225 : vector<1x1x128xf32> to vector<128xf32>
    %227 = vector.shape_cast %226 : vector<128xf32> to vector<1x1x128xf32>
    %228 = vector.broadcast %227 : vector<1x1x128xf32> to vector<8x8x128xf32>
    %229 = arith.mulf %224, %228 : vector<8x8x128xf32>
    %230 = arith.addf %200, %229 : vector<8x8x128xf32>
    %231 = vector.extract_strided_slice %202 {offsets = [4, 0, 0], sizes = [8, 8, 128], strides = [1, 1, 1]} : vector<14x8x128xf32> to vector<8x8x128xf32>
    %232 = vector.extract_strided_slice %0 {offsets = [4, 4, 0], sizes = [1, 1, 128], strides = [1, 1, 1]} : vector<7x7x128xf32> to vector<1x1x128xf32>
    %233 = vector.shape_cast %232 : vector<1x1x128xf32> to vector<128xf32>
    %234 = vector.shape_cast %233 : vector<128xf32> to vector<1x1x128xf32>
    %235 = vector.broadcast %234 : vector<1x1x128xf32> to vector<8x8x128xf32>
    %236 = arith.mulf %231, %235 : vector<8x8x128xf32>
    %237 = arith.addf %209, %236 : vector<8x8x128xf32>
    %238 = vector.extract_strided_slice %202 {offsets = [5, 0, 0], sizes = [8, 8, 128], strides = [1, 1, 1]} : vector<14x8x128xf32> to vector<8x8x128xf32>
    %239 = vector.extract_strided_slice %0 {offsets = [5, 4, 0], sizes = [1, 1, 128], strides = [1, 1, 1]} : vector<7x7x128xf32> to vector<1x1x128xf32>
    %240 = vector.shape_cast %239 : vector<1x1x128xf32> to vector<128xf32>
    %241 = vector.shape_cast %240 : vector<128xf32> to vector<1x1x128xf32>
    %242 = vector.broadcast %241 : vector<1x1x128xf32> to vector<8x8x128xf32>
    %243 = arith.mulf %238, %242 : vector<8x8x128xf32>
    %244 = arith.addf %216, %243 : vector<8x8x128xf32>
    %245 = vector.extract_strided_slice %202 {offsets = [6, 0, 0], sizes = [8, 8, 128], strides = [1, 1, 1]} : vector<14x8x128xf32> to vector<8x8x128xf32>
    %246 = vector.extract_strided_slice %0 {offsets = [6, 4, 0], sizes = [1, 1, 128], strides = [1, 1, 1]} : vector<7x7x128xf32> to vector<1x1x128xf32>
    %247 = vector.shape_cast %246 : vector<1x1x128xf32> to vector<128xf32>
    %248 = vector.shape_cast %247 : vector<128xf32> to vector<1x1x128xf32>
    %249 = vector.broadcast %248 : vector<1x1x128xf32> to vector<8x8x128xf32>
    %250 = arith.mulf %245, %249 : vector<8x8x128xf32>
    %251 = arith.addf %223, %250 : vector<8x8x128xf32>
    %c0_18 = arith.constant 0 : index
    %c0_19 = arith.constant 0 : index
    %c5 = arith.constant 5 : index
    %c0_20 = arith.constant 0 : index
    %252 = vector.load %arg2[%c0_18, %c0_19, %c5, %c0_20] : memref<1x14x14x128xf32, #tpu.memory_space<vmem>>, vector<1x14x8x128xf32>
    %253 = vector.shape_cast %252 : vector<1x14x8x128xf32> to vector<14x8x128xf32>
    %254 = vector.extract_strided_slice %253 {offsets = [0, 0, 0], sizes = [8, 8, 128], strides = [1, 1, 1]} : vector<14x8x128xf32> to vector<8x8x128xf32>
    %255 = vector.extract_strided_slice %0 {offsets = [0, 5, 0], sizes = [1, 1, 128], strides = [1, 1, 1]} : vector<7x7x128xf32> to vector<1x1x128xf32>
    %256 = vector.shape_cast %255 : vector<1x1x128xf32> to vector<128xf32>
    %257 = vector.shape_cast %256 : vector<128xf32> to vector<1x1x128xf32>
    %258 = vector.broadcast %257 : vector<1x1x128xf32> to vector<8x8x128xf32>
    %259 = arith.mulf %254, %258 : vector<8x8x128xf32>
    %260 = arith.addf %230, %259 : vector<8x8x128xf32>
    %261 = vector.extract_strided_slice %253 {offsets = [1, 0, 0], sizes = [8, 8, 128], strides = [1, 1, 1]} : vector<14x8x128xf32> to vector<8x8x128xf32>
    %262 = vector.extract_strided_slice %0 {offsets = [1, 5, 0], sizes = [1, 1, 128], strides = [1, 1, 1]} : vector<7x7x128xf32> to vector<1x1x128xf32>
    %263 = vector.shape_cast %262 : vector<1x1x128xf32> to vector<128xf32>
    %264 = vector.shape_cast %263 : vector<128xf32> to vector<1x1x128xf32>
    %265 = vector.broadcast %264 : vector<1x1x128xf32> to vector<8x8x128xf32>
    %266 = arith.mulf %261, %265 : vector<8x8x128xf32>
    %267 = arith.addf %237, %266 : vector<8x8x128xf32>
    %268 = vector.extract_strided_slice %253 {offsets = [2, 0, 0], sizes = [8, 8, 128], strides = [1, 1, 1]} : vector<14x8x128xf32> to vector<8x8x128xf32>
    %269 = vector.extract_strided_slice %0 {offsets = [2, 5, 0], sizes = [1, 1, 128], strides = [1, 1, 1]} : vector<7x7x128xf32> to vector<1x1x128xf32>
    %270 = vector.shape_cast %269 : vector<1x1x128xf32> to vector<128xf32>
    %271 = vector.shape_cast %270 : vector<128xf32> to vector<1x1x128xf32>
    %272 = vector.broadcast %271 : vector<1x1x128xf32> to vector<8x8x128xf32>
    %273 = arith.mulf %268, %272 : vector<8x8x128xf32>
    %274 = arith.addf %244, %273 : vector<8x8x128xf32>
    %275 = vector.extract_strided_slice %253 {offsets = [3, 0, 0], sizes = [8, 8, 128], strides = [1, 1, 1]} : vector<14x8x128xf32> to vector<8x8x128xf32>
    %276 = vector.extract_strided_slice %0 {offsets = [3, 5, 0], sizes = [1, 1, 128], strides = [1, 1, 1]} : vector<7x7x128xf32> to vector<1x1x128xf32>
    %277 = vector.shape_cast %276 : vector<1x1x128xf32> to vector<128xf32>
    %278 = vector.shape_cast %277 : vector<128xf32> to vector<1x1x128xf32>
    %279 = vector.broadcast %278 : vector<1x1x128xf32> to vector<8x8x128xf32>
    %280 = arith.mulf %275, %279 : vector<8x8x128xf32>
    %281 = arith.addf %251, %280 : vector<8x8x128xf32>
    %282 = vector.extract_strided_slice %253 {offsets = [4, 0, 0], sizes = [8, 8, 128], strides = [1, 1, 1]} : vector<14x8x128xf32> to vector<8x8x128xf32>
    %283 = vector.extract_strided_slice %0 {offsets = [4, 5, 0], sizes = [1, 1, 128], strides = [1, 1, 1]} : vector<7x7x128xf32> to vector<1x1x128xf32>
    %284 = vector.shape_cast %283 : vector<1x1x128xf32> to vector<128xf32>
    %285 = vector.shape_cast %284 : vector<128xf32> to vector<1x1x128xf32>
    %286 = vector.broadcast %285 : vector<1x1x128xf32> to vector<8x8x128xf32>
    %287 = arith.mulf %282, %286 : vector<8x8x128xf32>
    %288 = arith.addf %260, %287 : vector<8x8x128xf32>
    %289 = vector.extract_strided_slice %253 {offsets = [5, 0, 0], sizes = [8, 8, 128], strides = [1, 1, 1]} : vector<14x8x128xf32> to vector<8x8x128xf32>
    %290 = vector.extract_strided_slice %0 {offsets = [5, 5, 0], sizes = [1, 1, 128], strides = [1, 1, 1]} : vector<7x7x128xf32> to vector<1x1x128xf32>
    %291 = vector.shape_cast %290 : vector<1x1x128xf32> to vector<128xf32>
    %292 = vector.shape_cast %291 : vector<128xf32> to vector<1x1x128xf32>
    %293 = vector.broadcast %292 : vector<1x1x128xf32> to vector<8x8x128xf32>
    %294 = arith.mulf %289, %293 : vector<8x8x128xf32>
    %295 = arith.addf %267, %294 : vector<8x8x128xf32>
    %296 = vector.extract_strided_slice %253 {offsets = [6, 0, 0], sizes = [8, 8, 128], strides = [1, 1, 1]} : vector<14x8x128xf32> to vector<8x8x128xf32>
    %297 = vector.extract_strided_slice %0 {offsets = [6, 5, 0], sizes = [1, 1, 128], strides = [1, 1, 1]} : vector<7x7x128xf32> to vector<1x1x128xf32>
    %298 = vector.shape_cast %297 : vector<1x1x128xf32> to vector<128xf32>
    %299 = vector.shape_cast %298 : vector<128xf32> to vector<1x1x128xf32>
    %300 = vector.broadcast %299 : vector<1x1x128xf32> to vector<8x8x128xf32>
    %301 = arith.mulf %296, %300 : vector<8x8x128xf32>
    %302 = arith.addf %274, %301 : vector<8x8x128xf32>
    %c0_21 = arith.constant 0 : index
    %c0_22 = arith.constant 0 : index
    %c6 = arith.constant 6 : index
    %c0_23 = arith.constant 0 : index
    %303 = vector.load %arg2[%c0_21, %c0_22, %c6, %c0_23] : memref<1x14x14x128xf32, #tpu.memory_space<vmem>>, vector<1x14x8x128xf32>
    %304 = vector.shape_cast %303 : vector<1x14x8x128xf32> to vector<14x8x128xf32>
    %305 = vector.extract_strided_slice %304 {offsets = [0, 0, 0], sizes = [8, 8, 128], strides = [1, 1, 1]} : vector<14x8x128xf32> to vector<8x8x128xf32>
    %306 = vector.extract_strided_slice %0 {offsets = [0, 6, 0], sizes = [1, 1, 128], strides = [1, 1, 1]} : vector<7x7x128xf32> to vector<1x1x128xf32>
    %307 = vector.shape_cast %306 : vector<1x1x128xf32> to vector<128xf32>
    %308 = vector.shape_cast %307 : vector<128xf32> to vector<1x1x128xf32>
    %309 = vector.broadcast %308 : vector<1x1x128xf32> to vector<8x8x128xf32>
    %310 = arith.mulf %305, %309 : vector<8x8x128xf32>
    %311 = arith.addf %281, %310 : vector<8x8x128xf32>
    %312 = vector.extract_strided_slice %304 {offsets = [1, 0, 0], sizes = [8, 8, 128], strides = [1, 1, 1]} : vector<14x8x128xf32> to vector<8x8x128xf32>
    %313 = vector.extract_strided_slice %0 {offsets = [1, 6, 0], sizes = [1, 1, 128], strides = [1, 1, 1]} : vector<7x7x128xf32> to vector<1x1x128xf32>
    %314 = vector.shape_cast %313 : vector<1x1x128xf32> to vector<128xf32>
    %315 = vector.shape_cast %314 : vector<128xf32> to vector<1x1x128xf32>
    %316 = vector.broadcast %315 : vector<1x1x128xf32> to vector<8x8x128xf32>
    %317 = arith.mulf %312, %316 : vector<8x8x128xf32>
    %318 = arith.addf %288, %317 : vector<8x8x128xf32>
    %319 = vector.extract_strided_slice %304 {offsets = [2, 0, 0], sizes = [8, 8, 128], strides = [1, 1, 1]} : vector<14x8x128xf32> to vector<8x8x128xf32>
    %320 = vector.extract_strided_slice %0 {offsets = [2, 6, 0], sizes = [1, 1, 128], strides = [1, 1, 1]} : vector<7x7x128xf32> to vector<1x1x128xf32>
    %321 = vector.shape_cast %320 : vector<1x1x128xf32> to vector<128xf32>
    %322 = vector.shape_cast %321 : vector<128xf32> to vector<1x1x128xf32>
    %323 = vector.broadcast %322 : vector<1x1x128xf32> to vector<8x8x128xf32>
    %324 = arith.mulf %319, %323 : vector<8x8x128xf32>
    %325 = arith.addf %295, %324 : vector<8x8x128xf32>
    %326 = vector.extract_strided_slice %304 {offsets = [3, 0, 0], sizes = [8, 8, 128], strides = [1, 1, 1]} : vector<14x8x128xf32> to vector<8x8x128xf32>
    %327 = vector.extract_strided_slice %0 {offsets = [3, 6, 0], sizes = [1, 1, 128], strides = [1, 1, 1]} : vector<7x7x128xf32> to vector<1x1x128xf32>
    %328 = vector.shape_cast %327 : vector<1x1x128xf32> to vector<128xf32>
    %329 = vector.shape_cast %328 : vector<128xf32> to vector<1x1x128xf32>
    %330 = vector.broadcast %329 : vector<1x1x128xf32> to vector<8x8x128xf32>
    %331 = arith.mulf %326, %330 : vector<8x8x128xf32>
    %332 = arith.addf %302, %331 : vector<8x8x128xf32>
    %333 = vector.extract_strided_slice %304 {offsets = [4, 0, 0], sizes = [8, 8, 128], strides = [1, 1, 1]} : vector<14x8x128xf32> to vector<8x8x128xf32>
    %334 = vector.extract_strided_slice %0 {offsets = [4, 6, 0], sizes = [1, 1, 128], strides = [1, 1, 1]} : vector<7x7x128xf32> to vector<1x1x128xf32>
    %335 = vector.shape_cast %334 : vector<1x1x128xf32> to vector<128xf32>
    %336 = vector.shape_cast %335 : vector<128xf32> to vector<1x1x128xf32>
    %337 = vector.broadcast %336 : vector<1x1x128xf32> to vector<8x8x128xf32>
    %338 = arith.mulf %333, %337 : vector<8x8x128xf32>
    %339 = arith.addf %311, %338 : vector<8x8x128xf32>
    %340 = vector.extract_strided_slice %304 {offsets = [5, 0, 0], sizes = [8, 8, 128], strides = [1, 1, 1]} : vector<14x8x128xf32> to vector<8x8x128xf32>
    %341 = vector.extract_strided_slice %0 {offsets = [5, 6, 0], sizes = [1, 1, 128], strides = [1, 1, 1]} : vector<7x7x128xf32> to vector<1x1x128xf32>
    %342 = vector.shape_cast %341 : vector<1x1x128xf32> to vector<128xf32>
    %343 = vector.shape_cast %342 : vector<128xf32> to vector<1x1x128xf32>
    %344 = vector.broadcast %343 : vector<1x1x128xf32> to vector<8x8x128xf32>
    %345 = arith.mulf %340, %344 : vector<8x8x128xf32>
    %346 = arith.addf %318, %345 : vector<8x8x128xf32>
    %347 = vector.extract_strided_slice %304 {offsets = [6, 0, 0], sizes = [8, 8, 128], strides = [1, 1, 1]} : vector<14x8x128xf32> to vector<8x8x128xf32>
    %348 = vector.extract_strided_slice %0 {offsets = [6, 6, 0], sizes = [1, 1, 128], strides = [1, 1, 1]} : vector<7x7x128xf32> to vector<1x1x128xf32>
    %349 = vector.shape_cast %348 : vector<1x1x128xf32> to vector<128xf32>
    %350 = vector.shape_cast %349 : vector<128xf32> to vector<1x1x128xf32>
    %351 = vector.broadcast %350 : vector<1x1x128xf32> to vector<8x8x128xf32>
    %352 = arith.mulf %347, %351 : vector<8x8x128xf32>
    %353 = arith.addf %325, %352 : vector<8x8x128xf32>
    %354 = arith.addf %353, %332 : vector<8x8x128xf32>
    %355 = arith.addf %339, %346 : vector<8x8x128xf32>
    %356 = arith.addf %354, %355 : vector<8x8x128xf32>
    %c0_24 = arith.constant 0 : index
    %c0_25 = arith.constant 0 : index
    %c0_26 = arith.constant 0 : index
    %357 = vector.load %arg4[%c0_24, %c0_25, %c0_26] : memref<1x1x128xf32, #tpu.memory_space<vmem>>, vector<1x1x128xf32>
    %358 = vector.broadcast %357 : vector<1x1x128xf32> to vector<8x8x128xf32>
    %359 = arith.addf %356, %358 : vector<8x8x128xf32>
    %c0_27 = arith.constant 0 : index
    %c0_28 = arith.constant 0 : index
    %c0_29 = arith.constant 0 : index
    %c0_30 = arith.constant 0 : index
    %360 = vector.load %arg5[%c0_27, %c0_28, %c0_29, %c0_30] : memref<1x8x8x128xf32, #tpu.memory_space<vmem>>, vector<1x8x8x128xf32>
    %361 = vector.shape_cast %360 : vector<1x8x8x128xf32> to vector<8x8x128xf32>
    %362 = vector.shape_cast %359 : vector<8x8x128xf32> to vector<1x8x8x128xf32>
    tpu.vector_store %arg5[%c0_27, %c0_28, %c0_29, %c0_30], %362 {strides = array<i32>} : memref<1x8x8x128xf32, #tpu.memory_space<vmem>>, vector<1x8x8x128xf32>,
    return
  }
  func.func @transform_0(%arg0: i32, %arg1: i32) -> (i32, i32, i32, i32) {
    %c0_i32 = arith.constant 0 : i32
    %c0_i32_0 = arith.constant 0 : i32
    %c0_i32_1 = arith.constant 0 : i32
    return %arg0, %c0_i32, %c0_i32_0, %arg1 : i32, i32, i32, i32
  }
  func.func @transform_1(%arg0: i32, %arg1: i32) -> (i32, i32, i32) {
    %c0_i32 = arith.constant 0 : i32
    %c0_i32_0 = arith.constant 0 : i32
    %c0_i32_1 = arith.constant 0 : i32
    return %c0_i32, %c0_i32_0, %arg1 : i32, i32, i32
  }
  func.func @transform_2(%arg0: i32, %arg1: i32) -> (i32, i32, i32) {
    %c0_i32 = arith.constant 0 : i32
    %c0_i32_0 = arith.constant 0 : i32
    %c0_i32_1 = arith.constant 0 : i32
    return %c0_i32, %c0_i32_0, %arg1 : i32, i32, i32
  }
  func.func @transform_3(%arg0: i32, %arg1: i32) -> (i32, i32, i32, i32) {
    %c0_i32 = arith.constant 0 : i32
    %c0_i32_0 = arith.constant 0 : i32
    %c0_i32_1 = arith.constant 0 : i32
    return %arg0, %c0_i32, %c0_i32_0, %arg1 : i32, i32, i32, i32
  }
}

</mosaic_0001>

<llo_original>
// kernel: tpu_custom_call.1
$region0: #{tpu_custom_call.1}
  #allocation0 [shape = 'u32[]', space=smem, size = 0x4, offset = 0x4, fixed_abs, tag = 'smem constant byte address 0x4 - core index']
  #allocation1 [shape = 'u32[144,128]{1,0:T(1,128)}', space=vmem, size = 0x12000, scoped, tag = 'internal scratch']
  %s0 = inlined_call_operand.vmem [shape: f32[2,14,14,128], index: 0, kind: input, shape index: {}]
  %s1 = inlined_call_operand.vmem [shape: f32[7,7,128], index: 1, kind: input, shape index: {}]
  %s2 = inlined_call_operand.vmem [shape: f32[1,1,128], index: 2, kind: input, shape index: {}]
  %s3 = inlined_call_operand.hbm [shape: f32[2,8,8,128], index: 3, kind: output, shape index: {}]
  %s4 = sld [smem:[#allocation0]]
  $region45: #{tpu_custom_call.1} parent=0
    _
  %s6 = ssub.s32 1, %s4
  %s7 = scalar_select 0, %s6, %s4
  $region1: #{tpu_custom_call.1} parent=0
    #allocation2 [shape = 'u8[65536]{0}', space=vmem, size = 0x10000, scoped, tag = 'output window, operand 0']
    #allocation3 [shape = 's32[2]{0}', space=sflag, size = 0x8, scoped, tag = 'scoped memory for tpu_custom_call.1']
    %8 = vsyncpa [#allocation3], 0
    %s9 = scalar_lea.sflag [#allocation3], 1
    %10 = vsyncpa %s9, 0
    loop: start=0, step=1, limit=4
    $region2: #{tpu_custom_call.1} parent=1 // loop_pre_header
      _
    $region3: #{tpu_custom_call.1} parent=1 // loop_header
      %s12 = sphi 0, %s16
      %p13 = scmp.ge.s32.totalorder %s12, 4
      %s19 = sphi 0, %s31
      %s20 = sphi 0, %s27
      %s21 = sphi 0, %s19
      %s22 = sphi 0, %s20
      %s23 = sphi 0, %s21
      %s24 = sphi 0, %s22
      %s36 = sphi 0, %s38
      %s39 = sphi 0, %s36
      %s40 = sphi 0, %s39
      %s56 = sphi 0, %s40
      %s62 = sphi 0, %s64
      %s65 = sphi 0, %s62
      %s66 = sphi 0, %s65
      %s82 = sphi 0, %s66
      %s88 = sphi 0, %s90
      %s91 = sphi 0, %s88
      %s92 = sphi 0, %s91
      %s108 = sphi 0, %s92
      %s116 = sphi 0, %s118
      %s119 = sphi 0, %s116
      %s120 = sphi 0, %s119
      %s136 = sphi 0, %s120
    $region4: #{tpu_custom_call.1} parent=1 // loop_header_branch
      %15 = sbr.rel (%p13) target = $region8
    $region5: #{tpu_custom_call.1} parent=1 // loop_body
      %s17 = ssub.s32 %s12, 1
      %s18 = ssub.s32 %s12, 2
      %s25 = sadd.s32 1, %s20
      %p26 = scmp.ge.s32.totalorder %s25, 1
      %s27 = scalar_select %p26, 0, %s25
      %s28 = sadd.s32 1, %s19
      %s29 = scalar_select %p26, %s28, %s19
      %p30 = scmp.ge.s32.totalorder %s29, 2
      %s31 = scalar_select %p30, 0, %s29
      %s32 = ssub.s32 %s19, %s31
      %s33 = ssub.s32 %s20, %s27
      %s34 = sor.u32 %s32, %s33
      %p35 = scmp.eq.s32.totalorder %s34, 0
      %s37 = sadd.s32 %s36, 1
      %s38 = scalar_select %p35, %s36, %s37
      %p41 = pneg %p35
      %p42 = scmp.eq.s32.totalorder %s12, 1
      %p43 = por %p41, %p42
      %p44 = scmp.ne.s32.totalorder %s36, %s39
      %p45 = scmp.eq.s32.totalorder %s12, 0
      %p46 = por %p44, %p45
      %p47 = scmp.ne.s32.totalorder %s36, %s39
      %p48 = scmp.eq.s32.totalorder %s17, 1
      %p49 = por %p47, %p48
      %p50 = scmp.ne.s32.totalorder %s39, %s40
      %p51 = scmp.eq.s32.totalorder %s17, 0
      %p52 = por %p50, %p51
      %p53 = scmp.ne.s32.totalorder %s39, %s40
      %p54 = scmp.eq.s32.totalorder %s18, 1
      %p55 = por %p53, %p54
      %p57 = scmp.ne.s32.totalorder %s40, %s56
      %p58 = scmp.eq.s32.totalorder %s18, 0
      %p59 = por %p57, %p58
      %s60 = ssub.s32 %s20, %s27
      %p61 = scmp.eq.s32.totalorder %s60, 0
      %s63 = sadd.s32 %s62, 1
      %s64 = scalar_select %p61, %s62, %s63
      %p67 = pneg %p61
      %p68 = scmp.eq.s32.totalorder %s12, 1
      %p69 = por %p67, %p68
      %p70 = scmp.ne.s32.totalorder %s62, %s65
      %p71 = scmp.eq.s32.totalorder %s12, 0
      %p72 = por %p70, %p71
      %p73 = scmp.ne.s32.totalorder %s62, %s65
      %p74 = scmp.eq.s32.totalorder %s17, 1
      %p75 = por %p73, %p74
      %p76 = scmp.ne.s32.totalorder %s65, %s66
      %p77 = scmp.eq.s32.totalorder %s17, 0
      %p78 = por %p76, %p77
      %p79 = scmp.ne.s32.totalorder %s65, %s66
      %p80 = scmp.eq.s32.totalorder %s18, 1
      %p81 = por %p79, %p80
      %p83 = scmp.ne.s32.totalorder %s66, %s82
      %p84 = scmp.eq.s32.totalorder %s18, 0
      %p85 = por %p83, %p84
      %s86 = ssub.s32 %s20, %s27
      %p87 = scmp.eq.s32.totalorder %s86, 0
      %s89 = sadd.s32 %s88, 1
      %s90 = scalar_select %p87, %s88, %s89
      %p93 = pneg %p87
      %p94 = scmp.eq.s32.totalorder %s12, 1
      %p95 = por %p93, %p94
      %p96 = scmp.ne.s32.totalorder %s88, %s91
      %p97 = scmp.eq.s32.totalorder %s12, 0
      %p98 = por %p96, %p97
      %p99 = scmp.ne.s32.totalorder %s88, %s91
      %p100 = scmp.eq.s32.totalorder %s17, 1
      %p101 = por %p99, %p100
      %p102 = scmp.ne.s32.totalorder %s91, %s92
      %p103 = scmp.eq.s32.totalorder %s17, 0
      %p104 = por %p102, %p103
      %p105 = scmp.ne.s32.totalorder %s91, %s92
      %p106 = scmp.eq.s32.totalorder %s18, 1
      %p107 = por %p105, %p106
      %p109 = scmp.ne.s32.totalorder %s92, %s108
      %p110 = scmp.eq.s32.totalorder %s18, 0
      %p111 = por %p109, %p110
      %s112 = ssub.s32 %s19, %s31
      %s113 = ssub.s32 %s20, %s27
      %s114 = sor.u32 %s112, %s113
      %p115 = scmp.eq.s32.totalorder %s114, 0
      %s117 = sadd.s32 %s116, 1
      %s118 = scalar_select %p115, %s116, %s117
      %p121 = pneg %p115
      %p122 = scmp.eq.s32.totalorder %s12, 1
      %p123 = por %p121, %p122
      %p124 = scmp.ne.s32.totalorder %s116, %s119
      %p125 = scmp.eq.s32.totalorder %s12, 0
      %p126 = por %p124, %p125
      %p127 = scmp.ne.s32.totalorder %s116, %s119
      %p128 = scmp.eq.s32.totalorder %s17, 1
      %p129 = por %p127, %p128
      %p130 = scmp.ne.s32.totalorder %s119, %s120
      %p131 = scmp.eq.s32.totalorder %s17, 0
      %p132 = por %p130, %p131
      %p133 = scmp.ne.s32.totalorder %s119, %s120
      %p134 = scmp.eq.s32.totalorder %s18, 1
      %p135 = por %p133, %p134
      %p137 = scmp.ne.s32.totalorder %s120, %s136
      %p138 = scmp.eq.s32.totalorder %s18, 0
      %p139 = por %p137, %p138
      %p140 = scmp.le.s32.totalorder 1, %s12
      %p141 = scmp.lt.s32.totalorder %s12, 3
      %p142 = pnand %p140, %p141
      %p143 = pneg %p142
      // Predicated region
      $region9: #{tpu_custom_call.1} parent=5 // pred_check
        _
      $region10: #{tpu_custom_call.1} parent=5 // pred_check_branch
        %145 = sbr.rel (%p142) target = $region12
      $region11: #{tpu_custom_call.1} parent=5 // pred_region
        %s146 = ssub.s32 %s12, 1
        // Predicated region
        $region13: #{tpu_custom_call.1} parent=11 // pred_check
          %p147 = pneg %p78
        $region14: #{tpu_custom_call.1} parent=11 // pred_check_branch
          %149 = sbr.rel (%p147) target = $region16
        $region15: #{tpu_custom_call.1} parent=11 // pred_region
          %p150 = scmp.lt.s32.totalorder %s22, 0
          %s151 = scalar_select %p150, %s22, 0
          %s152 = smul.addr %s151, 8
          %s153 = scalar_lea.vmem %s1, %s152
        $region16: #{tpu_custom_call.1} parent=11 // pred_fallthru
          _
        // Predicated region
        $region17: #{tpu_custom_call.1} parent=11 // pred_check
          %p154 = pneg %p104
        $region18: #{tpu_custom_call.1} parent=11 // pred_check_branch
          %156 = sbr.rel (%p154) target = $region20
        $region19: #{tpu_custom_call.1} parent=11 // pred_region
          %p157 = scmp.lt.s32.totalorder %s22, 0
          %s158 = scalar_select %p157, %s22, 0
          %s159 = scalar_lea.vmem %s2, %s158
        $region20: #{tpu_custom_call.1} parent=11 // pred_fallthru
          _
      $region12: #{tpu_custom_call.1} parent=5 // pred_fallthru
        _
      %p160 = scmp.lt.s32.totalorder %s12, 2
      // Predicated region
      $region21: #{tpu_custom_call.1} parent=5 // pred_check
        %p161 = pneg %p160
      $region22: #{tpu_custom_call.1} parent=5 // pred_check_branch
        %163 = sbr.rel (%p161) target = $region24
      $region23: #{tpu_custom_call.1} parent=5 // pred_region
        // Predicated region
        $region25: #{tpu_custom_call.1} parent=23 // pred_check
          %p164 = pneg %p46
        $region26: #{tpu_custom_call.1} parent=23 // pred_check_branch
          %166 = sbr.rel (%p164) target = $region28
        $region27: #{tpu_custom_call.1} parent=23 // pred_region
          %p167 = scmp.lt.s32.totalorder %s19, 1
          %s168 = scalar_select %p167, %s19, 1
          %p169 = scmp.lt.s32.totalorder %s20, 0
          %s170 = scalar_select %p169, %s20, 0
          %s171 = smul.addr %s168, 28
          %s172 = sadd.s32 %s170, %s171
          %s173 = smul.addr %s172, 8
          %s174 = scalar_lea.vmem %s0, %s173
        $region28: #{tpu_custom_call.1} parent=23 // pred_fallthru
          _
      $region24: #{tpu_custom_call.1} parent=5 // pred_fallthru
        _
      %p175 = scmp.le.s32.totalorder 1, %s12
      %p176 = scmp.lt.s32.totalorder %s12, 3
      %p177 = pnand %p175, %p176
      %p178 = pneg %p177
      // Predicated region
      $region29: #{tpu_custom_call.1} parent=5 // pred_check
        _
      $region30: #{tpu_custom_call.1} parent=5 // pred_check_branch
        %180 = sbr.rel (%p177) target = $region32
      $region31: #{tpu_custom_call.1} parent=5 // pred_region
        %s181 = ssub.s32 %s12, 1
        %p182 = scmp.lt.s32.totalorder %s21, 1
        %s183 = scalar_select %p182, %s21, 1
        %p184 = scmp.lt.s32.totalorder %s22, 0
        %s185 = scalar_select %p184, %s22, 0
        %s186 = smul.addr %s183, 28
        %s187 = sadd.s32 %s185, %s186
        %s188 = smul.addr %s187, 8
        %s189 = scalar_lea.vmem %s0, %s188
        %p190 = pneg %p52
        %p191 = pneg %p49
        %p192 = scmp.lt.s32.totalorder %s22, 0
        %s193 = scalar_select %p192, %s22, 0
        %s194 = smul.addr %s193, 8
        %s195 = scalar_lea.vmem %s1, %s194
        %p196 = pneg %p78
        %p197 = pneg %p75
        %p198 = scmp.lt.s32.totalorder %s22, 0
        %s199 = scalar_select %p198, %s22, 0
        %s200 = scalar_lea.vmem %s2, %s199
        %p201 = pneg %p104
        %p202 = pneg %p101
        %p203 = pneg %p132
        %p204 = pneg %p129
        %s205 = sand.u32 %s119, 1
        %s206 = scalar_lea.sflag [#allocation3], %s205
        %s207 = sand.u32 %s119, 1
        %s208 = smul.addr %s207, 64
        %s209 = scalar_lea.vmem [#allocation2], %s208
        %p210 = scmp.lt.s32.totalorder %s21, 1
        %s211 = scalar_select %p210, %s21, 1
        %p212 = scmp.lt.s32.totalorder %s22, 0
        %s213 = scalar_select %p212, %s22, 0
        %s214 = smul.addr %s211, 28
        %s215 = sadd.s32 %s213, %s214
        %s216 = smul.addr %s215, 8
        %s217 = scalar_lea.vmem %s0, %s216
        %p218 = scmp.lt.s32.totalorder %s22, 0
        %s219 = scalar_select %p218, %s22, 0
        %s220 = smul.addr %s219, 8
        %s221 = scalar_lea.vmem %s1, %s220
        %p222 = scmp.lt.s32.totalorder %s22, 0
        %s223 = scalar_select %p222, %s22, 0
        %s224 = scalar_lea.vmem %s2, %s223
        %v225 = vld [vmem:[%s221] sm:$0x7f]
        %v226 = vld [vmem:[%s221 + $0x8] sm:$0x7f]
        %v227 = vld [vmem:[%s221 + $0x10] sm:$0x7f]
        %v228 = vld [vmem:[%s221 + $0x18] sm:$0x7f]
        %v229 = vld [vmem:[%s221 + $0x20] sm:$0x7f]
        %v230 = vld [vmem:[%s221 + $0x28] sm:$0x7f]
        %v231 = vld [vmem:[%s221 + $0x30] sm:$0x7f]
        %v232 = vld [vmem:[%s217] sm:$0xff]
        %v233 = vld [vmem:[%s217 + $0x10] sm:$0xff]
        %v234 = vld [vmem:[%s217 + $0x20] sm:$0xff]
        %v235 = vld [vmem:[%s217 + $0x30] sm:$0xff]
        %v236 = vld [vmem:[%s217 + $0x40] sm:$0xff]
        %v237 = vld [vmem:[%s217 + $0x50] sm:$0xff]
        %v238 = vld [vmem:[%s217 + $0x60] sm:$0xff]
        %v239 = vld [vmem:[%s217 + $0x70] sm:$0xff]
        %v240 = vld [vmem:[%s217 + $0x80] sm:$0xff]
        %v241 = vld [vmem:[%s217 + $0x90] sm:$0xff]
        %v242 = vld [vmem:[%s217 + $0xa0] sm:$0xff]
        %v243 = vld [vmem:[%s217 + $0xb0] sm:$0xff]
        %v244 = vld [vmem:[%s217 + $0xc0] sm:$0xff]
        %v245 = vld [vmem:[%s217 + $0xd0] sm:$0xff]
        %v246 = vlaneseq
        %v247 = vshrl.u32 %v246, 7
        %v248 = vsub.s32 0, %v247
        %v249 = vrot.slane %v225, %v248
        %v250 = vmul.f32 %v232, %v249
        %v251 = vmul.f32 %v233, %v249
        %v252 = vmul.f32 %v234, %v249
        %v253 = vmul.f32 %v235, %v249
        %v254 = vmul.f32 %v236, %v249
        %v255 = vmul.f32 %v237, %v249
        %v256 = vmul.f32 %v238, %v249
        %v257 = vmul.f32 %v239, %v249
        %v258 = vlaneseq
        %v259 = vshrl.u32 %v258, 7
        %v260 = vsub.s32 0, %v259
        %v261 = vrot.slane %v226, %v260
        %v262 = vmul.f32 %v233, %v261
        %v263 = vmul.f32 %v234, %v261
        %v264 = vmul.f32 %v235, %v261
        %v265 = vmul.f32 %v236, %v261
        %v266 = vmul.f32 %v237, %v261
        %v267 = vmul.f32 %v238, %v261
        %v268 = vmul.f32 %v239, %v261
        %v269 = vmul.f32 %v240, %v261
        %v270 = vlaneseq
        %v271 = vshrl.u32 %v270, 7
        %v272 = vsub.s32 0, %v271
        %v273 = vrot.slane %v227, %v272
        %v274 = vmul.f32 %v234, %v273
        %v275 = vmul.f32 %v235, %v273
        %v276 = vmul.f32 %v236, %v273
        %v277 = vmul.f32 %v237, %v273
        %v278 = vmul.f32 %v238, %v273
        %v279 = vmul.f32 %v239, %v273
        %v280 = vmul.f32 %v240, %v273
        %v281 = vmul.f32 %v241, %v273
        %v282 = vlaneseq
        %v283 = vshrl.u32 %v282, 7
        %v284 = vsub.s32 0, %v283
        %v285 = vrot.slane %v228, %v284
        %v286 = vmul.f32 %v235, %v285
        %v287 = vmul.f32 %v236, %v285
        %v288 = vmul.f32 %v237, %v285
        %v289 = vmul.f32 %v238, %v285
        %v290 = vmul.f32 %v239, %v285
        %v291 = vmul.f32 %v240, %v285
        %v292 = vmul.f32 %v241, %v285
        %v293 = vmul.f32 %v242, %v285
        %v294 = vlaneseq
        %v295 = vshrl.u32 %v294, 7
        %v296 = vsub.s32 0, %v295
        %v297 = vrot.slane %v229, %v296
        %v298 = vmul.f32 %v236, %v297
        %v299 = vmul.f32 %v237, %v297
        %v300 = vmul.f32 %v238, %v297
        %v301 = vmul.f32 %v239, %v297
        %v302 = vmul.f32 %v240, %v297
        %v303 = vmul.f32 %v241, %v297
        %v304 = vmul.f32 %v242, %v297
        %v305 = vmul.f32 %v243, %v297
        %v306 = vadd.f32 %v250, %v298
        %v307 = vadd.f32 %v251, %v299
        %v308 = vadd.f32 %v252, %v300
        %v309 = vadd.f32 %v253, %v301
        %v310 = vadd.f32 %v254, %v302
        %v311 = vadd.f32 %v255, %v303
        %v312 = vadd.f32 %v256, %v304
        %v313 = vadd.f32 %v257, %v305
        %v314 = vlaneseq
        %v315 = vshrl.u32 %v314, 7
        %v316 = vsub.s32 0, %v315
        %v317 = vrot.slane %v230, %v316
        %v318 = vmul.f32 %v237, %v317
        %v319 = vmul.f32 %v238, %v317
        %v320 = vmul.f32 %v239, %v317
        %v321 = vmul.f32 %v240, %v317
        %v322 = vmul.f32 %v241, %v317
        %v323 = vmul.f32 %v242, %v317
        %v324 = vmul.f32 %v243, %v317
        %v325 = vmul.f32 %v244, %v317
        %v326 = vadd.f32 %v262, %v318
        %v327 = vadd.f32 %v263, %v319
        %v328 = vadd.f32 %v264, %v320
        %v329 = vadd.f32 %v265, %v321
        %v330 = vadd.f32 %v266, %v322
        %v331 = vadd.f32 %v267, %v323
        %v332 = vadd.f32 %v268, %v324
        %v333 = vadd.f32 %v269, %v325
        %v334 = vlaneseq
        %v335 = vshrl.u32 %v334, 7
        %v336 = vsub.s32 0, %v335
        %v337 = vrot.slane %v231, %v336
        %v338 = vmul.f32 %v238, %v337
        %v339 = vmul.f32 %v239, %v337
        %v340 = vmul.f32 %v240, %v337
        %v341 = vmul.f32 %v241, %v337
        %v342 = vmul.f32 %v242, %v337
        %v343 = vmul.f32 %v243, %v337
        %v344 = vmul.f32 %v244, %v337
        %v345 = vmul.f32 %v245, %v337
        %v346 = vadd.f32 %v274, %v338
        %v347 = vadd.f32 %v275, %v339
        %v348 = vadd.f32 %v276, %v340
        %v349 = vadd.f32 %v277, %v341
        %v350 = vadd.f32 %v278, %v342
        %v351 = vadd.f32 %v279, %v343
        %v352 = vadd.f32 %v280, %v344
        %v353 = vadd.f32 %v281, %v345
        %v354 = vld [vmem:[%s217 + $0x1] sm:$0xff]
        %v355 = vld [vmem:[%s217 + $0x11] sm:$0xff]
        %v356 = vld [vmem:[%s217 + $0x21] sm:$0xff]
        %v357 = vld [vmem:[%s217 + $0x31] sm:$0xff]
        %v358 = vld [vmem:[%s217 + $0x41] sm:$0xff]
        %v359 = vld [vmem:[%s217 + $0x51] sm:$0xff]
        %v360 = vld [vmem:[%s217 + $0x61] sm:$0xff]
        %v361 = vld [vmem:[%s217 + $0x71] sm:$0xff]
        %v362 = vld [vmem:[%s217 + $0x81] sm:$0xff]
        %v363 = vld [vmem:[%s217 + $0x91] sm:$0xff]
        %v364 = vld [vmem:[%s217 + $0xa1] sm:$0xff]
        %v365 = vld [vmem:[%s217 + $0xb1] sm:$0xff]
        %v366 = vld [vmem:[%s217 + $0xc1] sm:$0xff]
        %v367 = vld [vmem:[%s217 + $0xd1] sm:$0xff]
        %v368 = vlaneseq
        %v369 = vshrl.u32 %v368, 7
        %v370 = vsub.s32 1, %v369
        %v371 = vrot.slane %v225, %v370
        %v372 = vmul.f32 %v354, %v371
        %v373 = vmul.f32 %v355, %v371
        %v374 = vmul.f32 %v356, %v371
        %v375 = vmul.f32 %v357, %v371
        %v376 = vmul.f32 %v358, %v371
        %v377 = vmul.f32 %v359, %v371
        %v378 = vmul.f32 %v360, %v371
        %v379 = vmul.f32 %v361, %v371
        %v380 = vadd.f32 %v286, %v372
        %v381 = vadd.f32 %v287, %v373
        %v382 = vadd.f32 %v288, %v374
        %v383 = vadd.f32 %v289, %v375
        %v384 = vadd.f32 %v290, %v376
        %v385 = vadd.f32 %v291, %v377
        %v386 = vadd.f32 %v292, %v378
        %v387 = vadd.f32 %v293, %v379
        %v388 = vlaneseq
        %v389 = vshrl.u32 %v388, 7
        %v390 = vsub.s32 1, %v389
        %v391 = vrot.slane %v226, %v390
        %v392 = vmul.f32 %v355, %v391
        %v393 = vmul.f32 %v356, %v391
        %v394 = vmul.f32 %v357, %v391
        %v395 = vmul.f32 %v358, %v391
        %v396 = vmul.f32 %v359, %v391
        %v397 = vmul.f32 %v360, %v391
        %v398 = vmul.f32 %v361, %v391
        %v399 = vmul.f32 %v362, %v391
        %v400 = vadd.f32 %v306, %v392
        %v401 = vadd.f32 %v307, %v393
        %v402 = vadd.f32 %v308, %v394
        %v403 = vadd.f32 %v309, %v395
        %v404 = vadd.f32 %v310, %v396
        %v405 = vadd.f32 %v311, %v397
        %v406 = vadd.f32 %v312, %v398
        %v407 = vadd.f32 %v313, %v399
        %v408 = vlaneseq
        %v409 = vshrl.u32 %v408, 7
        %v410 = vsub.s32 1, %v409
        %v411 = vrot.slane %v227, %v410
        %v412 = vmul.f32 %v356, %v411
        %v413 = vmul.f32 %v357, %v411
        %v414 = vmul.f32 %v358, %v411
        %v415 = vmul.f32 %v359, %v411
        %v416 = vmul.f32 %v360, %v411
        %v417 = vmul.f32 %v361, %v411
        %v418 = vmul.f32 %v362, %v411
        %v419 = vmul.f32 %v363, %v411
        %v420 = vadd.f32 %v326, %v412
        %v421 = vadd.f32 %v327, %v413
        %v422 = vadd.f32 %v328, %v414
        %v423 = vadd.f32 %v329, %v415
        %v424 = vadd.f32 %v330, %v416
        %v425 = vadd.f32 %v331, %v417
        %v426 = vadd.f32 %v332, %v418
        %v427 = vadd.f32 %v333, %v419
        %v428 = vlaneseq
        %v429 = vshrl.u32 %v428, 7
        %v430 = vsub.s32 1, %v429
        %v431 = vrot.slane %v228, %v430
        %v432 = vmul.f32 %v357, %v431
        %v433 = vmul.f32 %v358, %v431
        %v434 = vmul.f32 %v359, %v431
        %v435 = vmul.f32 %v360, %v431
        %v436 = vmul.f32 %v361, %v431
        %v437 = vmul.f32 %v362, %v431
        %v438 = vmul.f32 %v363, %v431
        %v439 = vmul.f32 %v364, %v431
        %v440 = vadd.f32 %v346, %v432
        %v441 = vadd.f32 %v347, %v433
        %v442 = vadd.f32 %v348, %v434
        %v443 = vadd.f32 %v349, %v435
        %v444 = vadd.f32 %v350, %v436
        %v445 = vadd.f32 %v351, %v437
        %v446 = vadd.f32 %v352, %v438
        %v447 = vadd.f32 %v353, %v439
        %v448 = vlaneseq
        %v449 = vshrl.u32 %v448, 7
        %v450 = vsub.s32 1, %v449
        %v451 = vrot.slane %v229, %v450
        %v452 = vmul.f32 %v358, %v451
        %v453 = vmul.f32 %v359, %v451
        %v454 = vmul.f32 %v360, %v451
        %v455 = vmul.f32 %v361, %v451
        %v456 = vmul.f32 %v362, %v451
        %v457 = vmul.f32 %v363, %v451
        %v458 = vmul.f32 %v364, %v451
        %v459 = vmul.f32 %v365, %v451
        %v460 = vadd.f32 %v380, %v452
        %v461 = vadd.f32 %v381, %v453
        %v462 = vadd.f32 %v382, %v454
        %v463 = vadd.f32 %v383, %v455
        %v464 = vadd.f32 %v384, %v456
        %v465 = vadd.f32 %v385, %v457
        %v466 = vadd.f32 %v386, %v458
        %v467 = vadd.f32 %v387, %v459
        %v468 = vlaneseq
        %v469 = vshrl.u32 %v468, 7
        %v470 = vsub.s32 1, %v469
        %v471 = vrot.slane %v230, %v470
        %v472 = vmul.f32 %v359, %v471
        %v473 = vmul.f32 %v360, %v471
        %v474 = vmul.f32 %v361, %v471
        %v475 = vmul.f32 %v362, %v471
        %v476 = vmul.f32 %v363, %v471
        %v477 = vmul.f32 %v364, %v471
        %v478 = vmul.f32 %v365, %v471
        %v479 = vmul.f32 %v366, %v471
        %v480 = vadd.f32 %v400, %v472
        %v481 = vadd.f32 %v401, %v473
        %v482 = vadd.f32 %v402, %v474
        %v483 = vadd.f32 %v403, %v475
        %v484 = vadd.f32 %v404, %v476
        %v485 = vadd.f32 %v405, %v477
        %v486 = vadd.f32 %v406, %v478
        %v487 = vadd.f32 %v407, %v479
        %v488 = vlaneseq
        %v489 = vshrl.u32 %v488, 7
        %v490 = vsub.s32 1, %v489
        %v491 = vrot.slane %v231, %v490
        %v492 = vmul.f32 %v360, %v491
        %v493 = vmul.f32 %v361, %v491
        %v494 = vmul.f32 %v362, %v491
        %v495 = vmul.f32 %v363, %v491
        %v496 = vmul.f32 %v364, %v491
        %v497 = vmul.f32 %v365, %v491
        %v498 = vmul.f32 %v366, %v491
        %v499 = vmul.f32 %v367, %v491
        %v500 = vadd.f32 %v420, %v492
        %v501 = vadd.f32 %v421, %v493
        %v502 = vadd.f32 %v422, %v494
        %v503 = vadd.f32 %v423, %v495
        %v504 = vadd.f32 %v424, %v496
        %v505 = vadd.f32 %v425, %v497
        %v506 = vadd.f32 %v426, %v498
        %v507 = vadd.f32 %v427, %v499
        %v508 = vld [vmem:[%s217 + $0x2] sm:$0xff]
        %v509 = vld [vmem:[%s217 + $0x12] sm:$0xff]
        %v510 = vld [vmem:[%s217 + $0x22] sm:$0xff]
        %v511 = vld [vmem:[%s217 + $0x32] sm:$0xff]
        %v512 = vld [vmem:[%s217 + $0x42] sm:$0xff]
        %v513 = vld [vmem:[%s217 + $0x52] sm:$0xff]
        %v514 = vld [vmem:[%s217 + $0x62] sm:$0xff]
        %v515 = vld [vmem:[%s217 + $0x72] sm:$0xff]
        %v516 = vld [vmem:[%s217 + $0x82] sm:$0xff]
        %v517 = vld [vmem:[%s217 + $0x92] sm:$0xff]
        %v518 = vld [vmem:[%s217 + $0xa2] sm:$0xff]
        %v519 = vld [vmem:[%s217 + $0xb2] sm:$0xff]
        %v520 = vld [vmem:[%s217 + $0xc2] sm:$0xff]
        %v521 = vld [vmem:[%s217 + $0xd2] sm:$0xff]
        %v522 = vlaneseq
        %v523 = vshrl.u32 %v522, 7
        %v524 = vsub.s32 2, %v523
        %v525 = vrot.slane %v225, %v524
        %v526 = vmul.f32 %v508, %v525
        %v527 = vmul.f32 %v509, %v525
        %v528 = vmul.f32 %v510, %v525
        %v529 = vmul.f32 %v511, %v525
        %v530 = vmul.f32 %v512, %v525
        %v531 = vmul.f32 %v513, %v525
        %v532 = vmul.f32 %v514, %v525
        %v533 = vmul.f32 %v515, %v525
        %v534 = vadd.f32 %v440, %v526
        %v535 = vadd.f32 %v441, %v527
        %v536 = vadd.f32 %v442, %v528
        %v537 = vadd.f32 %v443, %v529
        %v538 = vadd.f32 %v444, %v530
        %v539 = vadd.f32 %v445, %v531
        %v540 = vadd.f32 %v446, %v532
        %v541 = vadd.f32 %v447, %v533
        %v542 = vlaneseq
        %v543 = vshrl.u32 %v542, 7
        %v544 = vsub.s32 2, %v543
        %v545 = vrot.slane %v226, %v544
        %v546 = vmul.f32 %v509, %v545
        %v547 = vmul.f32 %v510, %v545
        %v548 = vmul.f32 %v511, %v545
        %v549 = vmul.f32 %v512, %v545
        %v550 = vmul.f32 %v513, %v545
        %v551 = vmul.f32 %v514, %v545
        %v552 = vmul.f32 %v515, %v545
        %v553 = vmul.f32 %v516, %v545
        %v554 = vadd.f32 %v460, %v546
        %v555 = vadd.f32 %v461, %v547
        %v556 = vadd.f32 %v462, %v548
        %v557 = vadd.f32 %v463, %v549
        %v558 = vadd.f32 %v464, %v550
        %v559 = vadd.f32 %v465, %v551
        %v560 = vadd.f32 %v466, %v552
        %v561 = vadd.f32 %v467, %v553
        %v562 = vlaneseq
        %v563 = vshrl.u32 %v562, 7
        %v564 = vsub.s32 2, %v563
        %v565 = vrot.slane %v227, %v564
        %v566 = vmul.f32 %v510, %v565
        %v567 = vmul.f32 %v511, %v565
        %v568 = vmul.f32 %v512, %v565
        %v569 = vmul.f32 %v513, %v565
        %v570 = vmul.f32 %v514, %v565
        %v571 = vmul.f32 %v515, %v565
        %v572 = vmul.f32 %v516, %v565
        %v573 = vmul.f32 %v517, %v565
        %v574 = vadd.f32 %v480, %v566
        %v575 = vadd.f32 %v481, %v567
        %v576 = vadd.f32 %v482, %v568
        %v577 = vadd.f32 %v483, %v569
        %v578 = vadd.f32 %v484, %v570
        %v579 = vadd.f32 %v485, %v571
        %v580 = vadd.f32 %v486, %v572
        %v581 = vadd.f32 %v487, %v573
        %v582 = vlaneseq
        %v583 = vshrl.u32 %v582, 7
        %v584 = vsub.s32 2, %v583
        %v585 = vrot.slane %v228, %v584
        %v586 = vmul.f32 %v511, %v585
        %v587 = vmul.f32 %v512, %v585
        %v588 = vmul.f32 %v513, %v585
        %v589 = vmul.f32 %v514, %v585
        %v590 = vmul.f32 %v515, %v585
        %v591 = vmul.f32 %v516, %v585
        %v592 = vmul.f32 %v517, %v585
        %v593 = vmul.f32 %v518, %v585
        %v594 = vadd.f32 %v500, %v586
        %v595 = vadd.f32 %v501, %v587
        %v596 = vadd.f32 %v502, %v588
        %v597 = vadd.f32 %v503, %v589
        %v598 = vadd.f32 %v504, %v590
        %v599 = vadd.f32 %v505, %v591
        %v600 = vadd.f32 %v506, %v592
        %v601 = vadd.f32 %v507, %v593
        %v602 = vlaneseq
        %v603 = vshrl.u32 %v602, 7
        %v604 = vsub.s32 2, %v603
        %v605 = vrot.slane %v229, %v604
        %v606 = vmul.f32 %v512, %v605
        %v607 = vmul.f32 %v513, %v605
        %v608 = vmul.f32 %v514, %v605
        %v609 = vmul.f32 %v515, %v605
        %v610 = vmul.f32 %v516, %v605
        %v611 = vmul.f32 %v517, %v605
        %v612 = vmul.f32 %v518, %v605
        %v613 = vmul.f32 %v519, %v605
        %v614 = vadd.f32 %v534, %v606
        %v615 = vadd.f32 %v535, %v607
        %v616 = vadd.f32 %v536, %v608
        %v617 = vadd.f32 %v537, %v609
        %v618 = vadd.f32 %v538, %v610
        %v619 = vadd.f32 %v539, %v611
        %v620 = vadd.f32 %v540, %v612
        %v621 = vadd.f32 %v541, %v613
        %v622 = vlaneseq
        %v623 = vshrl.u32 %v622, 7
        %v624 = vsub.s32 2, %v623
        %v625 = vrot.slane %v230, %v624
        %v626 = vmul.f32 %v513, %v625
        %v627 = vmul.f32 %v514, %v625
        %v628 = vmul.f32 %v515, %v625
        %v629 = vmul.f32 %v516, %v625
        %v630 = vmul.f32 %v517, %v625
        %v631 = vmul.f32 %v518, %v625
        %v632 = vmul.f32 %v519, %v625
        %v633 = vmul.f32 %v520, %v625
        %v634 = vadd.f32 %v554, %v626
        %v635 = vadd.f32 %v555, %v627
        %v636 = vadd.f32 %v556, %v628
        %v637 = vadd.f32 %v557, %v629
        %v638 = vadd.f32 %v558, %v630
        %v639 = vadd.f32 %v559, %v631
        %v640 = vadd.f32 %v560, %v632
        %v641 = vadd.f32 %v561, %v633
        %v642 = vlaneseq
        %v643 = vshrl.u32 %v642, 7
        %v644 = vsub.s32 2, %v643
        %v645 = vrot.slane %v231, %v644
        %v646 = vmul.f32 %v514, %v645
        %v647 = vmul.f32 %v515, %v645
        %v648 = vmul.f32 %v516, %v645
        %v649 = vmul.f32 %v517, %v645
        %v650 = vmul.f32 %v518, %v645
        %v651 = vmul.f32 %v519, %v645
        %v652 = vmul.f32 %v520, %v645
        %v653 = vmul.f32 %v521, %v645
        %v654 = vadd.f32 %v574, %v646
        %v655 = vadd.f32 %v575, %v647
        %v656 = vadd.f32 %v576, %v648
        %v657 = vadd.f32 %v577, %v649
        %v658 = vadd.f32 %v578, %v650
        %v659 = vadd.f32 %v579, %v651
        %v660 = vadd.f32 %v580, %v652
        %v661 = vadd.f32 %v581, %v653
        %v662 = vld [vmem:[%s217 + $0x3] sm:$0xff]
        %v663 = vld [vmem:[%s217 + $0x13] sm:$0xff]
        %v664 = vld [vmem:[%s217 + $0x23] sm:$0xff]
        %v665 = vld [vmem:[%s217 + $0x33] sm:$0xff]
        %v666 = vld [vmem:[%s217 + $0x43] sm:$0xff]
        %v667 = vld [vmem:[%s217 + $0x53] sm:$0xff]
        %v668 = vld [vmem:[%s217 + $0x63] sm:$0xff]
        %v669 = vld [vmem:[%s217 + $0x73] sm:$0xff]
        %v670 = vld [vmem:[%s217 + $0x83] sm:$0xff]
        %v671 = vld [vmem:[%s217 + $0x93] sm:$0xff]
        %v672 = vld [vmem:[%s217 + $0xa3] sm:$0xff]
        %v673 = vld [vmem:[%s217 + $0xb3] sm:$0xff]
        %v674 = vld [vmem:[%s217 + $0xc3] sm:$0xff]
        %v675 = vld [vmem:[%s217 + $0xd3] sm:$0xff]
        %v676 = vlaneseq
        %v677 = vshrl.u32 %v676, 7
        %v678 = vsub.s32 3, %v677
        %v679 = vrot.slane %v225, %v678
        %v680 = vmul.f32 %v662, %v679
        %v681 = vmul.f32 %v663, %v679
        %v682 = vmul.f32 %v664, %v679
        %v683 = vmul.f32 %v665, %v679
        %v684 = vmul.f32 %v666, %v679
        %v685 = vmul.f32 %v667, %v679
        %v686 = vmul.f32 %v668, %v679
        %v687 = vmul.f32 %v669, %v679
        %v688 = vadd.f32 %v594, %v680
        %v689 = vadd.f32 %v595, %v681
        %v690 = vadd.f32 %v596, %v682
        %v691 = vadd.f32 %v597, %v683
        %v692 = vadd.f32 %v598, %v684
        %v693 = vadd.f32 %v599, %v685
        %v694 = vadd.f32 %v600, %v686
        %v695 = vadd.f32 %v601, %v687
        %v696 = vlaneseq
        %v697 = vshrl.u32 %v696, 7
        %v698 = vsub.s32 3, %v697
        %v699 = vrot.slane %v226, %v698
        %v700 = vmul.f32 %v663, %v699
        %v701 = vmul.f32 %v664, %v699
        %v702 = vmul.f32 %v665, %v699
        %v703 = vmul.f32 %v666, %v699
        %v704 = vmul.f32 %v667, %v699
        %v705 = vmul.f32 %v668, %v699
        %v706 = vmul.f32 %v669, %v699
        %v707 = vmul.f32 %v670, %v699
        %v708 = vadd.f32 %v614, %v700
        %v709 = vadd.f32 %v615, %v701
        %v710 = vadd.f32 %v616, %v702
        %v711 = vadd.f32 %v617, %v703
        %v712 = vadd.f32 %v618, %v704
        %v713 = vadd.f32 %v619, %v705
        %v714 = vadd.f32 %v620, %v706
        %v715 = vadd.f32 %v621, %v707
        %v716 = vlaneseq
        %v717 = vshrl.u32 %v716, 7
        %v718 = vsub.s32 3, %v717
        %v719 = vrot.slane %v227, %v718
        %v720 = vmul.f32 %v664, %v719
        %v721 = vmul.f32 %v665, %v719
        %v722 = vmul.f32 %v666, %v719
        %v723 = vmul.f32 %v667, %v719
        %v724 = vmul.f32 %v668, %v719
        %v725 = vmul.f32 %v669, %v719
        %v726 = vmul.f32 %v670, %v719
        %v727 = vmul.f32 %v671, %v719
        %v728 = vadd.f32 %v634, %v720
        %v729 = vadd.f32 %v635, %v721
        %v730 = vadd.f32 %v636, %v722
        %v731 = vadd.f32 %v637, %v723
        %v732 = vadd.f32 %v638, %v724
        %v733 = vadd.f32 %v639, %v725
        %v734 = vadd.f32 %v640, %v726
        %v735 = vadd.f32 %v641, %v727
        %v736 = vlaneseq
        %v737 = vshrl.u32 %v736, 7
        %v738 = vsub.s32 3, %v737
        %v739 = vrot.slane %v228, %v738
        %v740 = vmul.f32 %v665, %v739
        %v741 = vmul.f32 %v666, %v739
        %v742 = vmul.f32 %v667, %v739
        %v743 = vmul.f32 %v668, %v739
        %v744 = vmul.f32 %v669, %v739
        %v745 = vmul.f32 %v670, %v739
        %v746 = vmul.f32 %v671, %v739
        %v747 = vmul.f32 %v672, %v739
        %v748 = vadd.f32 %v654, %v740
        %v749 = vadd.f32 %v655, %v741
        %v750 = vadd.f32 %v656, %v742
        %v751 = vadd.f32 %v657, %v743
        %v752 = vadd.f32 %v658, %v744
        %v753 = vadd.f32 %v659, %v745
        %v754 = vadd.f32 %v660, %v746
        %v755 = vadd.f32 %v661, %v747
        %v756 = vlaneseq
        %v757 = vshrl.u32 %v756, 7
        %v758 = vsub.s32 3, %v757
        %v759 = vrot.slane %v229, %v758
        %v760 = vmul.f32 %v666, %v759
        %v761 = vmul.f32 %v667, %v759
        %v762 = vmul.f32 %v668, %v759
        %v763 = vmul.f32 %v669, %v759
        %v764 = vmul.f32 %v670, %v759
        %v765 = vmul.f32 %v671, %v759
        %v766 = vmul.f32 %v672, %v759
        %v767 = vmul.f32 %v673, %v759
        %v768 = vadd.f32 %v688, %v760
        %v769 = vadd.f32 %v689, %v761
        %v770 = vadd.f32 %v690, %v762
        %v771 = vadd.f32 %v691, %v763
        %v772 = vadd.f32 %v692, %v764
        %v773 = vadd.f32 %v693, %v765
        %v774 = vadd.f32 %v694, %v766
        %v775 = vadd.f32 %v695, %v767
        %v776 = vlaneseq
        %v777 = vshrl.u32 %v776, 7
        %v778 = vsub.s32 3, %v777
        %v779 = vrot.slane %v230, %v778
        %v780 = vmul.f32 %v667, %v779
        %v781 = vmul.f32 %v668, %v779
        %v782 = vmul.f32 %v669, %v779
        %v783 = vmul.f32 %v670, %v779
        %v784 = vmul.f32 %v671, %v779
        %v785 = vmul.f32 %v672, %v779
        %v786 = vmul.f32 %v673, %v779
        %v787 = vmul.f32 %v674, %v779
        %v788 = vadd.f32 %v708, %v780
        %v789 = vadd.f32 %v709, %v781
        %v790 = vadd.f32 %v710, %v782
        %v791 = vadd.f32 %v711, %v783
        %v792 = vadd.f32 %v712, %v784
        %v793 = vadd.f32 %v713, %v785
        %v794 = vadd.f32 %v714, %v786
        %v795 = vadd.f32 %v715, %v787
        %v796 = vlaneseq
        %v797 = vshrl.u32 %v796, 7
        %v798 = vsub.s32 3, %v797
        %v799 = vrot.slane %v231, %v798
        %v800 = vmul.f32 %v668, %v799
        %v801 = vmul.f32 %v669, %v799
        %v802 = vmul.f32 %v670, %v799
        %v803 = vmul.f32 %v671, %v799
        %v804 = vmul.f32 %v672, %v799
        %v805 = vmul.f32 %v673, %v799
        %v806 = vmul.f32 %v674, %v799
        %v807 = vmul.f32 %v675, %v799
        %v808 = vadd.f32 %v728, %v800
        %v809 = vadd.f32 %v729, %v801
        %v810 = vadd.f32 %v730, %v802
        %v811 = vadd.f32 %v731, %v803
        %v812 = vadd.f32 %v732, %v804
        %v813 = vadd.f32 %v733, %v805
        %v814 = vadd.f32 %v734, %v806
        %v815 = vadd.f32 %v735, %v807
        %v816 = vld [vmem:[%s217 + $0x4] sm:$0xff]
        %v817 = vld [vmem:[%s217 + $0x14] sm:$0xff]
        %v818 = vld [vmem:[%s217 + $0x24] sm:$0xff]
        %v819 = vld [vmem:[%s217 + $0x34] sm:$0xff]
        %v820 = vld [vmem:[%s217 + $0x44] sm:$0xff]
        %v821 = vld [vmem:[%s217 + $0x54] sm:$0xff]
        %v822 = vld [vmem:[%s217 + $0x64] sm:$0xff]
        %v823 = vld [vmem:[%s217 + $0x74] sm:$0xff]
        %v824 = vld [vmem:[%s217 + $0x84] sm:$0xff]
        %v825 = vld [vmem:[%s217 + $0x94] sm:$0xff]
        %v826 = vld [vmem:[%s217 + $0xa4] sm:$0xff]
        %v827 = vld [vmem:[%s217 + $0xb4] sm:$0xff]
        %v828 = vld [vmem:[%s217 + $0xc4] sm:$0xff]
        %v829 = vld [vmem:[%s217 + $0xd4] sm:$0xff]
        %v830 = vlaneseq
        %v831 = vshrl.u32 %v830, 7
        %v832 = vsub.s32 4, %v831
        %v833 = vrot.slane %v225, %v832
        %v834 = vmul.f32 %v816, %v833
        %v835 = vmul.f32 %v817, %v833
        %v836 = vmul.f32 %v818, %v833
        %v837 = vmul.f32 %v819, %v833
        %v838 = vmul.f32 %v820, %v833
        %v839 = vmul.f32 %v821, %v833
        %v840 = vmul.f32 %v822, %v833
        %v841 = vmul.f32 %v823, %v833
        %v842 = vadd.f32 %v748, %v834
        %v843 = vadd.f32 %v749, %v835
        %v844 = vadd.f32 %v750, %v836
        %v845 = vadd.f32 %v751, %v837
        %v846 = vadd.f32 %v752, %v838
        %v847 = vadd.f32 %v753, %v839
        %v848 = vadd.f32 %v754, %v840
        %v849 = vadd.f32 %v755, %v841
        %v850 = vlaneseq
        %v851 = vshrl.u32 %v850, 7
        %v852 = vsub.s32 4, %v851
        %v853 = vrot.slane %v226, %v852
        %v854 = vmul.f32 %v817, %v853
        %v855 = vmul.f32 %v818, %v853
        %v856 = vmul.f32 %v819, %v853
        %v857 = vmul.f32 %v820, %v853
        %v858 = vmul.f32 %v821, %v853
        %v859 = vmul.f32 %v822, %v853
        %v860 = vmul.f32 %v823, %v853
        %v861 = vmul.f32 %v824, %v853
        %v862 = vadd.f32 %v768, %v854
        %v863 = vadd.f32 %v769, %v855
        %v864 = vadd.f32 %v770, %v856
        %v865 = vadd.f32 %v771, %v857
        %v866 = vadd.f32 %v772, %v858
        %v867 = vadd.f32 %v773, %v859
        %v868 = vadd.f32 %v774, %v860
        %v869 = vadd.f32 %v775, %v861
        %v870 = vlaneseq
        %v871 = vshrl.u32 %v870, 7
        %v872 = vsub.s32 4, %v871
        %v873 = vrot.slane %v227, %v872
        %v874 = vmul.f32 %v818, %v873
        %v875 = vmul.f32 %v819, %v873
        %v876 = vmul.f32 %v820, %v873
        %v877 = vmul.f32 %v821, %v873
        %v878 = vmul.f32 %v822, %v873
        %v879 = vmul.f32 %v823, %v873
        %v880 = vmul.f32 %v824, %v873
        %v881 = vmul.f32 %v825, %v873
        %v882 = vadd.f32 %v788, %v874
        %v883 = vadd.f32 %v789, %v875
        %v884 = vadd.f32 %v790, %v876
        %v885 = vadd.f32 %v791, %v877
        %v886 = vadd.f32 %v792, %v878
        %v887 = vadd.f32 %v793, %v879
        %v888 = vadd.f32 %v794, %v880
        %v889 = vadd.f32 %v795, %v881
        %v890 = vlaneseq
        %v891 = vshrl.u32 %v890, 7
        %v892 = vsub.s32 4, %v891
        %v893 = vrot.slane %v228, %v892
        %v894 = vmul.f32 %v819, %v893
        %v895 = vmul.f32 %v820, %v893
        %v896 = vmul.f32 %v821, %v893
        %v897 = vmul.f32 %v822, %v893
        %v898 = vmul.f32 %v823, %v893
        %v899 = vmul.f32 %v824, %v893
        %v900 = vmul.f32 %v825, %v893
        %v901 = vmul.f32 %v826, %v893
        %v902 = vadd.f32 %v808, %v894
        %v903 = vadd.f32 %v809, %v895
        %v904 = vadd.f32 %v810, %v896
        %v905 = vadd.f32 %v811, %v897
        %v906 = vadd.f32 %v812, %v898
        %v907 = vadd.f32 %v813, %v899
        %v908 = vadd.f32 %v814, %v900
        %v909 = vadd.f32 %v815, %v901
        %v910 = vlaneseq
        %v911 = vshrl.u32 %v910, 7
        %v912 = vsub.s32 4, %v911
        %v913 = vrot.slane %v229, %v912
        %v914 = vmul.f32 %v820, %v913
        %v915 = vmul.f32 %v821, %v913
        %v916 = vmul.f32 %v822, %v913
        %v917 = vmul.f32 %v823, %v913
        %v918 = vmul.f32 %v824, %v913
        %v919 = vmul.f32 %v825, %v913
        %v920 = vmul.f32 %v826, %v913
        %v921 = vmul.f32 %v827, %v913
        %v922 = vadd.f32 %v842, %v914
        %v923 = vadd.f32 %v843, %v915
        %v924 = vadd.f32 %v844, %v916
        %v925 = vadd.f32 %v845, %v917
        %v926 = vadd.f32 %v846, %v918
        %v927 = vadd.f32 %v847, %v919
        %v928 = vadd.f32 %v848, %v920
        %v929 = vadd.f32 %v849, %v921
        %v930 = vlaneseq
        %v931 = vshrl.u32 %v930, 7
        %v932 = vsub.s32 4, %v931
        %v933 = vrot.slane %v230, %v932
        %v934 = vmul.f32 %v821, %v933
        %v935 = vmul.f32 %v822, %v933
        %v936 = vmul.f32 %v823, %v933
        %v937 = vmul.f32 %v824, %v933
        %v938 = vmul.f32 %v825, %v933
        %v939 = vmul.f32 %v826, %v933
        %v940 = vmul.f32 %v827, %v933
        %v941 = vmul.f32 %v828, %v933
        %v942 = vadd.f32 %v862, %v934
        %v943 = vadd.f32 %v863, %v935
        %v944 = vadd.f32 %v864, %v936
        %v945 = vadd.f32 %v865, %v937
        %v946 = vadd.f32 %v866, %v938
        %v947 = vadd.f32 %v867, %v939
        %v948 = vadd.f32 %v868, %v940
        %v949 = vadd.f32 %v869, %v941
        %v950 = vlaneseq
        %v951 = vshrl.u32 %v950, 7
        %v952 = vsub.s32 4, %v951
        %v953 = vrot.slane %v231, %v952
        %v954 = vmul.f32 %v822, %v953
        %v955 = vmul.f32 %v823, %v953
        %v956 = vmul.f32 %v824, %v953
        %v957 = vmul.f32 %v825, %v953
        %v958 = vmul.f32 %v826, %v953
        %v959 = vmul.f32 %v827, %v953
        %v960 = vmul.f32 %v828, %v953
        %v961 = vmul.f32 %v829, %v953
        %v962 = vadd.f32 %v882, %v954
        %v963 = vadd.f32 %v883, %v955
        %v964 = vadd.f32 %v884, %v956
        %v965 = vadd.f32 %v885, %v957
        %v966 = vadd.f32 %v886, %v958
        %v967 = vadd.f32 %v887, %v959
        %v968 = vadd.f32 %v888, %v960
        %v969 = vadd.f32 %v889, %v961
        %v970 = vld [vmem:[%s217 + $0x5] sm:$0xff]
        %v971 = vld [vmem:[%s217 + $0x15] sm:$0xff]
        %v972 = vld [vmem:[%s217 + $0x25] sm:$0xff]
        %v973 = vld [vmem:[%s217 + $0x35] sm:$0xff]
        %v974 = vld [vmem:[%s217 + $0x45] sm:$0xff]
        %v975 = vld [vmem:[%s217 + $0x55] sm:$0xff]
        %v976 = vld [vmem:[%s217 + $0x65] sm:$0xff]
        %v977 = vld [vmem:[%s217 + $0x75] sm:$0xff]
        %v978 = vld [vmem:[%s217 + $0x85] sm:$0xff]
        %v979 = vld [vmem:[%s217 + $0x95] sm:$0xff]
        %v980 = vld [vmem:[%s217 + $0xa5] sm:$0xff]
        %v981 = vld [vmem:[%s217 + $0xb5] sm:$0xff]
        %v982 = vld [vmem:[%s217 + $0xc5] sm:$0xff]
        %v983 = vld [vmem:[%s217 + $0xd5] sm:$0xff]
        %v984 = vlaneseq
        %v985 = vshrl.u32 %v984, 7
        %v986 = vsub.s32 5, %v985
        %v987 = vrot.slane %v225, %v986
        %v988 = vmul.f32 %v970, %v987
        %v989 = vmul.f32 %v971, %v987
        %v990 = vmul.f32 %v972, %v987
        %v991 = vmul.f32 %v973, %v987
        %v992 = vmul.f32 %v974, %v987
        %v993 = vmul.f32 %v975, %v987
        %v994 = vmul.f32 %v976, %v987
        %v995 = vmul.f32 %v977, %v987
        %v996 = vadd.f32 %v902, %v988
        %v997 = vadd.f32 %v903, %v989
        %v998 = vadd.f32 %v904, %v990
        %v999 = vadd.f32 %v905, %v991
        %v1000 = vadd.f32 %v906, %v992
        %v1001 = vadd.f32 %v907, %v993
        %v1002 = vadd.f32 %v908, %v994
        %v1003 = vadd.f32 %v909, %v995
        %v1004 = vlaneseq
        %v1005 = vshrl.u32 %v1004, 7
        %v1006 = vsub.s32 5, %v1005
        %v1007 = vrot.slane %v226, %v1006
        %v1008 = vmul.f32 %v971, %v1007
        %v1009 = vmul.f32 %v972, %v1007
        %v1010 = vmul.f32 %v973, %v1007
        %v1011 = vmul.f32 %v974, %v1007
        %v1012 = vmul.f32 %v975, %v1007
        %v1013 = vmul.f32 %v976, %v1007
        %v1014 = vmul.f32 %v977, %v1007
        %v1015 = vmul.f32 %v978, %v1007
        %v1016 = vadd.f32 %v922, %v1008
        %v1017 = vadd.f32 %v923, %v1009
        %v1018 = vadd.f32 %v924, %v1010
        %v1019 = vadd.f32 %v925, %v1011
        %v1020 = vadd.f32 %v926, %v1012
        %v1021 = vadd.f32 %v927, %v1013
        %v1022 = vadd.f32 %v928, %v1014
        %v1023 = vadd.f32 %v929, %v1015
        %v1024 = vlaneseq
        %v1025 = vshrl.u32 %v1024, 7
        %v1026 = vsub.s32 5, %v1025
        %v1027 = vrot.slane %v227, %v1026
        %v1028 = vmul.f32 %v972, %v1027
        %v1029 = vmul.f32 %v973, %v1027
        %v1030 = vmul.f32 %v974, %v1027
        %v1031 = vmul.f32 %v975, %v1027
        %v1032 = vmul.f32 %v976, %v1027
        %v1033 = vmul.f32 %v977, %v1027
        %v1034 = vmul.f32 %v978, %v1027
        %v1035 = vmul.f32 %v979, %v1027
        %v1036 = vadd.f32 %v942, %v1028
        %v1037 = vadd.f32 %v943, %v1029
        %v1038 = vadd.f32 %v944, %v1030
        %v1039 = vadd.f32 %v945, %v1031
        %v1040 = vadd.f32 %v946, %v1032
        %v1041 = vadd.f32 %v947, %v1033
        %v1042 = vadd.f32 %v948, %v1034
        %v1043 = vadd.f32 %v949, %v1035
        %v1044 = vlaneseq
        %v1045 = vshrl.u32 %v1044, 7
        %v1046 = vsub.s32 5, %v1045
        %v1047 = vrot.slane %v228, %v1046
        %v1048 = vmul.f32 %v973, %v1047
        %v1049 = vmul.f32 %v974, %v1047
        %v1050 = vmul.f32 %v975, %v1047
        %v1051 = vmul.f32 %v976, %v1047
        %v1052 = vmul.f32 %v977, %v1047
        %v1053 = vmul.f32 %v978, %v1047
        %v1054 = vmul.f32 %v979, %v1047
        %v1055 = vmul.f32 %v980, %v1047
        %v1056 = vadd.f32 %v962, %v1048
        %v1057 = vadd.f32 %v963, %v1049
        %v1058 = vadd.f32 %v964, %v1050
        %v1059 = vadd.f32 %v965, %v1051
        %v1060 = vadd.f32 %v966, %v1052
        %v1061 = vadd.f32 %v967, %v1053
        %v1062 = vadd.f32 %v968, %v1054
        %v1063 = vadd.f32 %v969, %v1055
        %v1064 = vlaneseq
        %v1065 = vshrl.u32 %v1064, 7
        %v1066 = vsub.s32 5, %v1065
        %v1067 = vrot.slane %v229, %v1066
        %v1068 = vmul.f32 %v974, %v1067
        %v1069 = vmul.f32 %v975, %v1067
        %v1070 = vmul.f32 %v976, %v1067
        %v1071 = vmul.f32 %v977, %v1067
        %v1072 = vmul.f32 %v978, %v1067
        %v1073 = vmul.f32 %v979, %v1067
        %v1074 = vmul.f32 %v980, %v1067
        %v1075 = vmul.f32 %v981, %v1067
        %v1076 = vadd.f32 %v996, %v1068
        %v1077 = vadd.f32 %v997, %v1069
        %v1078 = vadd.f32 %v998, %v1070
        %v1079 = vadd.f32 %v999, %v1071
        %v1080 = vadd.f32 %v1000, %v1072
        %v1081 = vadd.f32 %v1001, %v1073
        %v1082 = vadd.f32 %v1002, %v1074
        %v1083 = vadd.f32 %v1003, %v1075
        %v1084 = vlaneseq
        %v1085 = vshrl.u32 %v1084, 7
        %v1086 = vsub.s32 5, %v1085
        %v1087 = vrot.slane %v230, %v1086
        %v1088 = vmul.f32 %v975, %v1087
        %v1089 = vmul.f32 %v976, %v1087
        %v1090 = vmul.f32 %v977, %v1087
        %v1091 = vmul.f32 %v978, %v1087
        %v1092 = vmul.f32 %v979, %v1087
        %v1093 = vmul.f32 %v980, %v1087
        %v1094 = vmul.f32 %v981, %v1087
        %v1095 = vmul.f32 %v982, %v1087
        %v1096 = vadd.f32 %v1016, %v1088
        %v1097 = vadd.f32 %v1017, %v1089
        %v1098 = vadd.f32 %v1018, %v1090
        %v1099 = vadd.f32 %v1019, %v1091
        %v1100 = vadd.f32 %v1020, %v1092
        %v1101 = vadd.f32 %v1021, %v1093
        %v1102 = vadd.f32 %v1022, %v1094
        %v1103 = vadd.f32 %v1023, %v1095
        %v1104 = vlaneseq
        %v1105 = vshrl.u32 %v1104, 7
        %v1106 = vsub.s32 5, %v1105
        %v1107 = vrot.slane %v231, %v1106
        %v1108 = vmul.f32 %v976, %v1107
        %v1109 = vmul.f32 %v977, %v1107
        %v1110 = vmul.f32 %v978, %v1107
        %v1111 = vmul.f32 %v979, %v1107
        %v1112 = vmul.f32 %v980, %v1107
        %v1113 = vmul.f32 %v981, %v1107
        %v1114 = vmul.f32 %v982, %v1107
        %v1115 = vmul.f32 %v983, %v1107
        %v1116 = vadd.f32 %v1036, %v1108
        %v1117 = vadd.f32 %v1037, %v1109
        %v1118 = vadd.f32 %v1038, %v1110
        %v1119 = vadd.f32 %v1039, %v1111
        %v1120 = vadd.f32 %v1040, %v1112
        %v1121 = vadd.f32 %v1041, %v1113
        %v1122 = vadd.f32 %v1042, %v1114
        %v1123 = vadd.f32 %v1043, %v1115
        %v1124 = vld [vmem:[%s217 + $0x6] sm:$0xff]
        %v1125 = vld [vmem:[%s217 + $0x16] sm:$0xff]
        %v1126 = vld [vmem:[%s217 + $0x26] sm:$0xff]
        %v1127 = vld [vmem:[%s217 + $0x36] sm:$0xff]
        %v1128 = vld [vmem:[%s217 + $0x46] sm:$0xff]
        %v1129 = vld [vmem:[%s217 + $0x56] sm:$0xff]
        %v1130 = vld [vmem:[%s217 + $0x66] sm:$0xff]
        %v1131 = vld [vmem:[%s217 + $0x76] sm:$0xff]
        %v1132 = vld [vmem:[%s217 + $0x86] sm:$0xff]
        %v1133 = vld [vmem:[%s217 + $0x96] sm:$0xff]
        %v1134 = vld [vmem:[%s217 + $0xa6] sm:$0xff]
        %v1135 = vld [vmem:[%s217 + $0xb6] sm:$0xff]
        %v1136 = vld [vmem:[%s217 + $0xc6] sm:$0xff]
        %v1137 = vld [vmem:[%s217 + $0xd6] sm:$0xff]
        %v1138 = vlaneseq
        %v1139 = vshrl.u32 %v1138, 7
        %v1140 = vsub.s32 6, %v1139
        %v1141 = vrot.slane %v225, %v1140
        %v1142 = vmul.f32 %v1124, %v1141
        %v1143 = vmul.f32 %v1125, %v1141
        %v1144 = vmul.f32 %v1126, %v1141
        %v1145 = vmul.f32 %v1127, %v1141
        %v1146 = vmul.f32 %v1128, %v1141
        %v1147 = vmul.f32 %v1129, %v1141
        %v1148 = vmul.f32 %v1130, %v1141
        %v1149 = vmul.f32 %v1131, %v1141
        %v1150 = vadd.f32 %v1056, %v1142
        %v1151 = vadd.f32 %v1057, %v1143
        %v1152 = vadd.f32 %v1058, %v1144
        %v1153 = vadd.f32 %v1059, %v1145
        %v1154 = vadd.f32 %v1060, %v1146
        %v1155 = vadd.f32 %v1061, %v1147
        %v1156 = vadd.f32 %v1062, %v1148
        %v1157 = vadd.f32 %v1063, %v1149
        %v1158 = vlaneseq
        %v1159 = vshrl.u32 %v1158, 7
        %v1160 = vsub.s32 6, %v1159
        %v1161 = vrot.slane %v226, %v1160
        %v1162 = vmul.f32 %v1125, %v1161
        %v1163 = vmul.f32 %v1126, %v1161
        %v1164 = vmul.f32 %v1127, %v1161
        %v1165 = vmul.f32 %v1128, %v1161
        %v1166 = vmul.f32 %v1129, %v1161
        %v1167 = vmul.f32 %v1130, %v1161
        %v1168 = vmul.f32 %v1131, %v1161
        %v1169 = vmul.f32 %v1132, %v1161
        %v1170 = vadd.f32 %v1076, %v1162
        %v1171 = vadd.f32 %v1077, %v1163
        %v1172 = vadd.f32 %v1078, %v1164
        %v1173 = vadd.f32 %v1079, %v1165
        %v1174 = vadd.f32 %v1080, %v1166
        %v1175 = vadd.f32 %v1081, %v1167
        %v1176 = vadd.f32 %v1082, %v1168
        %v1177 = vadd.f32 %v1083, %v1169
        %v1178 = vlaneseq
        %v1179 = vshrl.u32 %v1178, 7
        %v1180 = vsub.s32 6, %v1179
        %v1181 = vrot.slane %v227, %v1180
        %v1182 = vmul.f32 %v1126, %v1181
        %v1183 = vmul.f32 %v1127, %v1181
        %v1184 = vmul.f32 %v1128, %v1181
        %v1185 = vmul.f32 %v1129, %v1181
        %v1186 = vmul.f32 %v1130, %v1181
        %v1187 = vmul.f32 %v1131, %v1181
        %v1188 = vmul.f32 %v1132, %v1181
        %v1189 = vmul.f32 %v1133, %v1181
        %v1190 = vadd.f32 %v1096, %v1182
        %v1191 = vadd.f32 %v1097, %v1183
        %v1192 = vadd.f32 %v1098, %v1184
        %v1193 = vadd.f32 %v1099, %v1185
        %v1194 = vadd.f32 %v1100, %v1186
        %v1195 = vadd.f32 %v1101, %v1187
        %v1196 = vadd.f32 %v1102, %v1188
        %v1197 = vadd.f32 %v1103, %v1189
        %v1198 = vlaneseq
        %v1199 = vshrl.u32 %v1198, 7
        %v1200 = vsub.s32 6, %v1199
        %v1201 = vrot.slane %v228, %v1200
        %v1202 = vmul.f32 %v1127, %v1201
        %v1203 = vmul.f32 %v1128, %v1201
        %v1204 = vmul.f32 %v1129, %v1201
        %v1205 = vmul.f32 %v1130, %v1201
        %v1206 = vmul.f32 %v1131, %v1201
        %v1207 = vmul.f32 %v1132, %v1201
        %v1208 = vmul.f32 %v1133, %v1201
        %v1209 = vmul.f32 %v1134, %v1201
        %v1210 = vadd.f32 %v1116, %v1202
        %v1211 = vadd.f32 %v1117, %v1203
        %v1212 = vadd.f32 %v1118, %v1204
        %v1213 = vadd.f32 %v1119, %v1205
        %v1214 = vadd.f32 %v1120, %v1206
        %v1215 = vadd.f32 %v1121, %v1207
        %v1216 = vadd.f32 %v1122, %v1208
        %v1217 = vadd.f32 %v1123, %v1209
        %v1218 = vlaneseq
        %v1219 = vshrl.u32 %v1218, 7
        %v1220 = vsub.s32 6, %v1219
        %v1221 = vrot.slane %v229, %v1220
        %v1222 = vmul.f32 %v1128, %v1221
        %v1223 = vmul.f32 %v1129, %v1221
        %v1224 = vmul.f32 %v1130, %v1221
        %v1225 = vmul.f32 %v1131, %v1221
        %v1226 = vmul.f32 %v1132, %v1221
        %v1227 = vmul.f32 %v1133, %v1221
        %v1228 = vmul.f32 %v1134, %v1221
        %v1229 = vmul.f32 %v1135, %v1221
        %v1230 = vadd.f32 %v1150, %v1222
        %v1231 = vadd.f32 %v1151, %v1223
        %v1232 = vadd.f32 %v1152, %v1224
        %v1233 = vadd.f32 %v1153, %v1225
        %v1234 = vadd.f32 %v1154, %v1226
        %v1235 = vadd.f32 %v1155, %v1227
        %v1236 = vadd.f32 %v1156, %v1228
        %v1237 = vadd.f32 %v1157, %v1229
        %v1238 = vlaneseq
        %v1239 = vshrl.u32 %v1238, 7
        %v1240 = vsub.s32 6, %v1239
        %v1241 = vrot.slane %v230, %v1240
        %v1242 = vmul.f32 %v1129, %v1241
        %v1243 = vmul.f32 %v1130, %v1241
        %v1244 = vmul.f32 %v1131, %v1241
        %v1245 = vmul.f32 %v1132, %v1241
        %v1246 = vmul.f32 %v1133, %v1241
        %v1247 = vmul.f32 %v1134, %v1241
        %v1248 = vmul.f32 %v1135, %v1241
        %v1249 = vmul.f32 %v1136, %v1241
        %v1250 = vadd.f32 %v1170, %v1242
        %v1251 = vadd.f32 %v1171, %v1243
        %v1252 = vadd.f32 %v1172, %v1244
        %v1253 = vadd.f32 %v1173, %v1245
        %v1254 = vadd.f32 %v1174, %v1246
        %v1255 = vadd.f32 %v1175, %v1247
        %v1256 = vadd.f32 %v1176, %v1248
        %v1257 = vadd.f32 %v1177, %v1249
        %v1258 = vlaneseq
        %v1259 = vshrl.u32 %v1258, 7
        %v1260 = vsub.s32 6, %v1259
        %v1261 = vrot.slane %v231, %v1260
        %v1262 = vmul.f32 %v1130, %v1261
        %v1263 = vmul.f32 %v1131, %v1261
        %v1264 = vmul.f32 %v1132, %v1261
        %v1265 = vmul.f32 %v1133, %v1261
        %v1266 = vmul.f32 %v1134, %v1261
        %v1267 = vmul.f32 %v1135, %v1261
        %v1268 = vmul.f32 %v1136, %v1261
        %v1269 = vmul.f32 %v1137, %v1261
        %v1270 = vadd.f32 %v1190, %v1262
        %v1271 = vadd.f32 %v1191, %v1263
        %v1272 = vadd.f32 %v1192, %v1264
        %v1273 = vadd.f32 %v1193, %v1265
        %v1274 = vadd.f32 %v1194, %v1266
        %v1275 = vadd.f32 %v1195, %v1267
        %v1276 = vadd.f32 %v1196, %v1268
        %v1277 = vadd.f32 %v1197, %v1269
        %v1278 = vadd.f32 %v1270, %v1210
        %v1279 = vadd.f32 %v1271, %v1211
        %v1280 = vadd.f32 %v1272, %v1212
        %v1281 = vadd.f32 %v1273, %v1213
        %v1282 = vadd.f32 %v1274, %v1214
        %v1283 = vadd.f32 %v1275, %v1215
        %v1284 = vadd.f32 %v1276, %v1216
        %v1285 = vadd.f32 %v1277, %v1217
        %v1286 = vadd.f32 %v1230, %v1250
        %v1287 = vadd.f32 %v1231, %v1251
        %v1288 = vadd.f32 %v1232, %v1252
        %v1289 = vadd.f32 %v1233, %v1253
        %v1290 = vadd.f32 %v1234, %v1254
        %v1291 = vadd.f32 %v1235, %v1255
        %v1292 = vadd.f32 %v1236, %v1256
        %v1293 = vadd.f32 %v1237, %v1257
        %v1294 = vadd.f32 %v1278, %v1286
        %v1295 = vadd.f32 %v1279, %v1287
        %v1296 = vadd.f32 %v1280, %v1288
        %v1297 = vadd.f32 %v1281, %v1289
        %v1298 = vadd.f32 %v1282, %v1290
        %v1299 = vadd.f32 %v1283, %v1291
        %v1300 = vadd.f32 %v1284, %v1292
        %v1301 = vadd.f32 %v1285, %v1293
        %v1302 = vld [vmem:[%s224] sm:$0x1]
        %v1304 = vlaneseq
        %v1305 = vshrl.u32 %v1304, 7
        %v1306 = vsub.s32 0, %v1305
        %v1307 = vrot.slane %v1302, %v1306
        %v1309 = vadd.f32 %v1294, %v1307
        %v1310 = vadd.f32 %v1295, %v1307
        %v1311 = vadd.f32 %v1296, %v1307
        %v1312 = vadd.f32 %v1297, %v1307
        %v1313 = vadd.f32 %v1298, %v1307
        %v1314 = vadd.f32 %v1299, %v1307
        %v1315 = vadd.f32 %v1300, %v1307
        %v1316 = vadd.f32 %v1301, %v1307
        %1317 = vst [vmem:[%s209] sm:$0xff] %v1309
        %1318 = vst [vmem:[%s209 + $0x8] sm:$0xff] %v1310
        %1319 = vst [vmem:[%s209 + $0x10] sm:$0xff] %v1311
        %1320 = vst [vmem:[%s209 + $0x18] sm:$0xff] %v1312
        %1321 = vst [vmem:[%s209 + $0x20] sm:$0xff] %v1313
        %1322 = vst [vmem:[%s209 + $0x28] sm:$0xff] %v1314
        %1323 = vst [vmem:[%s209 + $0x30] sm:$0xff] %v1315
        %1324 = vst [vmem:[%s209 + $0x38] sm:$0xff] %v1316
        %s1325 = sand.u32 %s119, 1
        %s1326 = scalar_lea.sflag [#allocation3], %s1325
        %s1327 = sand.u32 %s119, 1
        %s1328 = smul.addr %s1327, 64
        %s1329 = scalar_lea.vmem [#allocation2], %s1328
        // Predicated region
        $region33: #{tpu_custom_call.1} parent=31 // pred_check
          %p1330 = pneg %p129
        $region34: #{tpu_custom_call.1} parent=31 // pred_check_branch
          %1332 = sbr.rel (%p1330) target = $region36
        $region35: #{tpu_custom_call.1} parent=31 // pred_region
          %s1334 = ssub.s32 1024, 1024
          %1335 = vsyncadd %s1326, %s1334
          %s1336 = smul.addr %s21, 8
          %s1337 = sadd.s32 %s22, %s1336
          %s1338 = smul.addr %s1337, 128
          %s1339 = scalar_lea.hbm %s3, %s1338
          %s1340 = sshll.u32 %s1329, 4
          %s1341 = int_to_ptr.vmem [resolvable:$true] %s1340
          %1346 = dma.vmem_to_hbm [thread:$0]  %s1341, 1024, %s1339, %s1326, 128, 128, 8
        $region36: #{tpu_custom_call.1} parent=31 // pred_fallthru
          _
      $region32: #{tpu_custom_call.1} parent=5 // pred_fallthru
        _
      %p1347 = scmp.le.s32.totalorder 2, %s12
      // Predicated region
      $region37: #{tpu_custom_call.1} parent=5 // pred_check
        %p1348 = pneg %p1347
      $region38: #{tpu_custom_call.1} parent=5 // pred_check_branch
        %1350 = sbr.rel (%p1348) target = $region40
      $region39: #{tpu_custom_call.1} parent=5 // pred_region
        %s1351 = ssub.s32 %s12, 2
        // Predicated region
        $region41: #{tpu_custom_call.1} parent=39 // pred_check
          %p1352 = pneg %p135
        $region42: #{tpu_custom_call.1} parent=39 // pred_check_branch
          %1354 = sbr.rel (%p1352) target = $region44
        $region43: #{tpu_custom_call.1} parent=39 // pred_region
          %s1355 = sand.u32 %s120, 1
          %s1356 = scalar_lea.sflag [#allocation3], %s1355
          %s1357 = sand.u32 %s120, 1
          %s1358 = smul.addr %s1357, 64
          %s1359 = scalar_lea.vmem [#allocation2], %s1358
          %1360 = dma.done %s1356, 1024
        $region44: #{tpu_custom_call.1} parent=39 // pred_fallthru
          _
      $region40: #{tpu_custom_call.1} parent=5 // pred_fallthru
        _
    $region6: #{tpu_custom_call.1} parent=1 // loop_footer
      %s16 = sadd.s32 1, %s12
    $region7: #{tpu_custom_call.1} parent=1 // loop_footer_branch
      %11 = sbr.rel target = $region3
    $region8: #{tpu_custom_call.1} parent=1 // loop_exit
      _
    %1361 = vsyncpa [#allocation3], 1
    %s1362 = scalar_lea.sflag [#allocation3], 1
    %1363 = vsyncpa %s1362, 1

</llo_original>
